<compile_context>
chip_gen: v7x
topology: tpu7x:2x2x1
jax: 0.10.0
libtpu: 0.0.40
codegen_flags: <defaults>
</compile_context>

<pallas_src>
import jax
import jax.numpy as jnp
from jax.experimental import pallas as pl
from jax.experimental.pallas import tpu as pltpu

HIDDEN = 768
NUM_CLASSES = 2


def _round_up(x, m):
    return (x + m - 1) // m * m


# ----------------------------- Pallas kernel ------------------------------ #
def fused_pooler_head_kernel(x_ref, pw_ref, pb_ref, w_ref, b_ref, o_ref):
    """Fused BERT pooler + pair-classification head for one batch tile.

    x_ref : [2, Bt, H]  pre-pooler vectors (row-block 0: sentence 1, 1: sentence 2)
    pw_ref: [H, H]      pooler weight
    pb_ref: [1, H]      pooler bias
    w_ref : [3H, 2]     stacked head weight  [w1+w3; w2-w3; w4]
    b_ref : [1, 2]      head bias
    o_ref : [Bt, 2]     log-softmax output
    """
    bt = o_ref.shape[0]

    # One [2*Bt, H] @ [H, H] MXU pass pools BOTH sentences, then tanh (EUP).
    xp = jnp.concatenate([x_ref[0], x_ref[1]], axis=0)                # [2Bt, H]
    pooled = jnp.tanh(
        jnp.dot(xp, pw_ref[...], preferred_element_type=jnp.float32)
        + pb_ref[...])                                                # [2Bt, H]
    v1 = pooled[:bt]                                                  # [Bt, H]
    v2 = pooled[bt:]                                                  # [Bt, H]

    # cat([v1, v2, v1-v2, v1*v2]) @ W.T + b  ==  [v1 | v2 | v1*v2] @ W_stack + b
    feat = jnp.concatenate([v1, v2, v1 * v2], axis=-1)                # [Bt, 3H]
    logits = (jnp.dot(feat, w_ref[...], preferred_element_type=jnp.float32)
              + b_ref[...])                                           # [Bt, 2]

    # Closed-form 2-class log_softmax (no cross-lane reduction).
    l0 = logits[:, 0:1]
    l1 = logits[:, 1:2]
    m = jnp.maximum(l0, l1)
    lse = m + jnp.log(1.0 + jnp.exp(-jnp.abs(l0 - l1)))               # [Bt, 1]
    o_ref[...] = logits - lse


def model4_pooler_head(x_pre, pool_w, pool_b, dense_w, dense_b, *, block_b=512):
    """x_pre: [2, B, H] pre-pooler vectors for the two sentences of each pair."""
    two, B, H = x_pre.shape
    assert two == 2 and H == HIDDEN

    # Batch tile: multiple of 8 sublanes; 512 keeps double-buffered inputs
    # (~14 MiB total incl. pool_w) inside scoped VMEM on v5e/v6e/v7x.
    bt = min(block_b, max(8, _round_up(B, 8)))
    b_pad = _round_up(max(B, bt), bt)
    if b_pad != B:
        x_pre = jnp.pad(x_pre, ((0, 0), (0, b_pad - B), (0, 0)))

    # Fold the 4 weight chunks of Linear(3072, 2) into one [3H, 2] stack.
    wt = dense_w.T.astype(jnp.float32)                                # [4H, 2]
    w1 = wt[0 * H:1 * H]
    w2 = wt[1 * H:2 * H]
    w3 = wt[2 * H:3 * H]
    w4 = wt[3 * H:4 * H]
    w_stack = jnp.concatenate([w1 + w3, w2 - w3, w4], axis=0)         # [3H, 2]
    b2d = dense_b.reshape(1, NUM_CLASSES).astype(jnp.float32)
    pb2d = pool_b.reshape(1, H).astype(jnp.float32)

    out = pl.pallas_call(
        fused_pooler_head_kernel,
        out_shape=jax.ShapeDtypeStruct((b_pad, NUM_CLASSES), jnp.float32),
        grid=(b_pad // bt,),
        in_specs=[
            pl.BlockSpec((2, bt, H), lambda i: (0, i, 0)),            # x tile
            pl.BlockSpec((H, H), lambda i: (0, 0)),                   # pool_w
            pl.BlockSpec((1, H), lambda i: (0, 0)),                   # pool_b
            pl.BlockSpec((3 * H, NUM_CLASSES), lambda i: (0, 0)),     # W_stack
            pl.BlockSpec((1, NUM_CLASSES), lambda i: (0, 0)),         # bias
        ],
        out_specs=pl.BlockSpec((bt, NUM_CLASSES), lambda i: (i, 0)),
        compiler_params=pltpu.CompilerParams(
            dimension_semantics=("parallel",)),
    )(x_pre.astype(jnp.float32), pool_w.astype(jnp.float32), pb2d, w_stack, b2d)
    return out[:B]


# -------------------- deterministic stand-in "BERT" glue ------------------ #
def fake_bert_prepool(params, ids, token_type_ids, attention_mask):
    """Plain-JAX surrogate: embedding + masked mean-pool -> [B, 768].
    (The tanh pooler itself lives inside the Pallas kernel.)"""
    emb = params["tok_emb"][ids] + params["type_emb"][token_type_ids]   # [B,S,H]
    mask = attention_mask.astype(jnp.float32)[..., None]                # [B,S,1]
    return jnp.sum(emb * mask, axis=1) / jnp.maximum(
        jnp.sum(mask, axis=1), 1.0)                                     # [B,H]


def model4_forward(params, ids1, tt1, am1, ids2, tt2, am2):
    x1 = fake_bert_prepool(params, ids1, tt1, am1)                      # [B,H]
    x2 = fake_bert_prepool(params, ids2, tt2, am2)                      # [B,H]
    x_pre = jnp.stack([x1, x2], axis=0)                                 # [2,B,H]
    # Dropout(0.1) is identity in eval/inference mode.
    return model4_pooler_head(x_pre, params["pool_w"], params["pool_b"],
                              params["dense2_w"], params["dense2_b"])


# --------------------------------- main ------------------------------------ #
if __name__ == "__main__":
    B, S, VOCAB = 2, 8, 32

    key = jax.random.PRNGKey(0)
    k = jax.random.split(key, 8)

    params = {
        "tok_emb": 0.02 * jax.random.normal(k[0], (VOCAB, HIDDEN), jnp.float32),
        "type_emb": 0.02 * jax.random.normal(k[1], (2, HIDDEN), jnp.float32),
        "pool_w": 0.02 * jax.random.normal(k[2], (HIDDEN, HIDDEN), jnp.float32),
        "pool_b": jnp.zeros((HIDDEN,), jnp.float32),
        # nn.Linear(768*4, 2): weight [2, 3072], bias [2]
        "dense2_w": 0.02 * jax.random.normal(k[3], (NUM_CLASSES, 4 * HIDDEN),
                                             jnp.float32),
        "dense2_b": 0.01 * jax.random.normal(k[4], (NUM_CLASSES,), jnp.float32),
    }

    ids1 = jax.random.randint(k[5], (B, S), 0, VOCAB, jnp.int32)
    ids2 = jax.random.randint(k[6], (B, S), 0, VOCAB, jnp.int32)
    tt1 = jnp.zeros((B, S), jnp.int32)
    tt2 = jnp.ones((B, S), jnp.int32)
    am1 = jnp.ones((B, S), jnp.int32)
    am2 = jnp.ones((B, S), jnp.int32)

    out = model4_forward(params, ids1, tt1, am1, ids2, tt2, am2)
    out = jax.block_until_ready(out)

    # sanity: reference pooler + head in plain JAX
    x1 = fake_bert_prepool(params, ids1, tt1, am1)
    x2 = fake_bert_prepool(params, ids2, tt2, am2)
    v1 = jnp.tanh(x1 @ params["pool_w"] + params["pool_b"])
    v2 = jnp.tanh(x2 @ params["pool_w"] + params["pool_b"])
    feat = jnp.concatenate([v1, v2, v1 - v2, v1 * v2], axis=1)
    logits_ref = feat @ params["dense2_w"].T + params["dense2_b"]
    ref = jax.nn.log_softmax(logits_ref, axis=1)
    assert out.shape == (B, NUM_CLASSES)
    assert jnp.allclose(out, ref, atol=1e-5), (out, ref)

    print("KERNEL_OK")
</pallas_src>

<mosaic_0001>
module attributes {stable_mosaic.version = 11 : i64} {
  func.func @fused_pooler_head_kernel(%arg0: i32, %arg1: memref<2x8x768xf32, #tpu.memory_space<vmem>>, %arg2: memref<768x768xf32, #tpu.memory_space<vmem>>, %arg3: memref<1x768xf32, #tpu.memory_space<vmem>>, %arg4: memref<2304x2xf32, #tpu.memory_space<vmem>>, %arg5: memref<1x2xf32, #tpu.memory_space<vmem>>, %arg6: memref<8x2xf32, #tpu.memory_space<vmem>>) attributes {dimension_semantics = [#tpu.dimension_semantics<parallel>], iteration_bounds = array<i64: 1>, scalar_prefetch = 0 : i64, scratch_operands = 0 : i64, tpu.core_type = #tpu.core_type<tc>, window_params = [{transform_indices = @transform_0, window_bounds = array<i64: 2, 8, 768>}, {pipeline_mode = #tpu.pipeline_mode<synchronous>, transform_indices = @transform_1, window_bounds = array<i64: 768, 768>}, {pipeline_mode = #tpu.pipeline_mode<synchronous>, transform_indices = @transform_2, window_bounds = array<i64: 1, 768>}, {pipeline_mode = #tpu.pipeline_mode<synchronous>, transform_indices = @transform_3, window_bounds = array<i64: 2304, 2>}, {pipeline_mode = #tpu.pipeline_mode<synchronous>, transform_indices = @transform_4, window_bounds = array<i64: 1, 2>}, {transform_indices = @transform_5, window_bounds = array<i64: 8, 2>}]} {
    %c0 = arith.constant 0 : index
    %c0_0 = arith.constant 0 : index
    %c0_1 = arith.constant 0 : index
    %0 = vector.load %arg1[%c0, %c0_0, %c0_1] : memref<2x8x768xf32, #tpu.memory_space<vmem>>, vector<1x8x768xf32>
    %1 = vector.shape_cast %0 : vector<1x8x768xf32> to vector<8x768xf32>
    %c1 = arith.constant 1 : index
    %c0_2 = arith.constant 0 : index
    %c0_3 = arith.constant 0 : index
    %2 = vector.load %arg1[%c1, %c0_2, %c0_3] : memref<2x8x768xf32, #tpu.memory_space<vmem>>, vector<1x8x768xf32>
    %3 = vector.shape_cast %2 : vector<1x8x768xf32> to vector<8x768xf32>
    %4 = tpu.concatenate %1, %3 in 0 : vector<8x768xf32>, vector<8x768xf32> -> vector<16x768xf32>
    %c0_4 = arith.constant 0 : index
    %c0_5 = arith.constant 0 : index
    %5 = vector.load %arg2[%c0_4, %c0_5] : memref<768x768xf32, #tpu.memory_space<vmem>>, vector<768x768xf32>
    %cst = arith.constant dense<0.000000e+00> : vector<16x768xf32>
    %6 = tpu.matmul %4, %5, %cst {dimension_numbers = #tpu.dot_dimension_numbers<[1], [0], [0], [1], [0, 0, 1, 1], [], []>} : vector<16x768xf32>, vector<768x768xf32>, vector<16x768xf32> -> vector<16x768xf32>
    %c0_6 = arith.constant 0 : index
    %c0_7 = arith.constant 0 : index
    %7 = vector.load %arg3[%c0_6, %c0_7] : memref<1x768xf32, #tpu.memory_space<vmem>>, vector<1x768xf32>
    %8 = vector.broadcast %7 : vector<1x768xf32> to vector<16x768xf32>
    %9 = arith.addf %6, %8 : vector<16x768xf32>
    %10 = math.tanh %9 : vector<16x768xf32>
    %11 = vector.extract_strided_slice %10 {offsets = [0, 0], sizes = [8, 768], strides = [1, 1]} : vector<16x768xf32> to vector<8x768xf32>
    %12 = vector.extract_strided_slice %10 {offsets = [8, 0], sizes = [8, 768], strides = [1, 1]} : vector<16x768xf32> to vector<8x768xf32>
    %13 = arith.mulf %11, %12 : vector<8x768xf32>
    %14 = tpu.concatenate %11, %12, %13 in 1 : vector<8x768xf32>, vector<8x768xf32>, vector<8x768xf32> -> vector<8x2304xf32>
    %c0_8 = arith.constant 0 : index
    %c0_9 = arith.constant 0 : index
    %15 = vector.load %arg4[%c0_8, %c0_9] : memref<2304x2xf32, #tpu.memory_space<vmem>>, vector<2304x2xf32>
    %cst_10 = arith.constant dense<0.000000e+00> : vector<8x2xf32>
    %16 = tpu.matmul %14, %15, %cst_10 {dimension_numbers = #tpu.dot_dimension_numbers<[1], [0], [0], [1], [0, 0, 1, 1], [], []>} : vector<8x2304xf32>, vector<2304x2xf32>, vector<8x2xf32> -> vector<8x2xf32>
    %c0_11 = arith.constant 0 : index
    %c0_12 = arith.constant 0 : index
    %17 = vector.load %arg5[%c0_11, %c0_12] : memref<1x2xf32, #tpu.memory_space<vmem>>, vector<1x2xf32>
    %18 = vector.broadcast %17 : vector<1x2xf32> to vector<8x2xf32>
    %19 = arith.addf %16, %18 : vector<8x2xf32>
    %20 = vector.extract_strided_slice %19 {offsets = [0, 0], sizes = [8, 1], strides = [1, 1]} : vector<8x2xf32> to vector<8x1xf32>
    %21 = vector.extract_strided_slice %19 {offsets = [0, 1], sizes = [8, 1], strides = [1, 1]} : vector<8x2xf32> to vector<8x1xf32>
    %22 = arith.maximumf %20, %21 : vector<8x1xf32>
    %23 = arith.subf %20, %21 : vector<8x1xf32>
    %24 = math.absf %23 : vector<8x1xf32>
    %cst_13 = arith.constant 0.000000e+00 : f32
    %25 = vector.broadcast %cst_13 : f32 to vector<8x1xf32>
    %26 = arith.subf %25, %24 : vector<8x1xf32>
    %27 = math.exp %26 : vector<8x1xf32>
    %cst_14 = arith.constant 1.000000e+00 : f32
    %28 = vector.broadcast %cst_14 : f32 to vector<8x1xf32>
    %29 = arith.addf %28, %27 : vector<8x1xf32>
    %30 = math.log %29 : vector<8x1xf32>
    %31 = arith.addf %22, %30 : vector<8x1xf32>
    %32 = vector.broadcast %31 : vector<8x1xf32> to vector<8x2xf32>
    %33 = arith.subf %19, %32 : vector<8x2xf32>
    %c0_15 = arith.constant 0 : index
    %c0_16 = arith.constant 0 : index
    %34 = vector.load %arg6[%c0_15, %c0_16] : memref<8x2xf32, #tpu.memory_space<vmem>>, vector<8x2xf32>
    tpu.vector_store %arg6[%c0_15, %c0_16], %33 {strides = array<i32>} : memref<8x2xf32, #tpu.memory_space<vmem>>, vector<8x2xf32>,
    return
  }
  func.func @transform_0(%arg0: i32) -> (i32, i32, i32) {
    %c0_i32 = arith.constant 0 : i32
    %c0_i32_0 = arith.constant 0 : i32
    %c0_i32_1 = arith.constant 0 : i32
    return %c0_i32, %arg0, %c0_i32_0 : i32, i32, i32
  }
  func.func @transform_1(%arg0: i32) -> (i32, i32) {
    %c0_i32 = arith.constant 0 : i32
    %c0_i32_0 = arith.constant 0 : i32
    %c0_i32_1 = arith.constant 0 : i32
    return %c0_i32, %c0_i32_0 : i32, i32
  }
  func.func @transform_2(%arg0: i32) -> (i32, i32) {
    %c0_i32 = arith.constant 0 : i32
    %c0_i32_0 = arith.constant 0 : i32
    %c0_i32_1 = arith.constant 0 : i32
    return %c0_i32, %c0_i32_0 : i32, i32
  }
  func.func @transform_3(%arg0: i32) -> (i32, i32) {
    %c0_i32 = arith.constant 0 : i32
    %c0_i32_0 = arith.constant 0 : i32
    %c0_i32_1 = arith.constant 0 : i32
    return %c0_i32, %c0_i32_0 : i32, i32
  }
  func.func @transform_4(%arg0: i32) -> (i32, i32) {
    %c0_i32 = arith.constant 0 : i32
    %c0_i32_0 = arith.constant 0 : i32
    %c0_i32_1 = arith.constant 0 : i32
    return %c0_i32, %c0_i32_0 : i32, i32
  }
  func.func @transform_5(%arg0: i32) -> (i32, i32) {
    %c0_i32 = arith.constant 0 : i32
    %c0_i32_0 = arith.constant 0 : i32
    return %arg0, %c0_i32 : i32, i32
  }
}

</mosaic_0001>

<llo_original>
// kernel: tpu_custom_call.1
$region0: #{tpu_custom_call.1}
  #allocation0 [shape = 'u32[]', space=smem, size = 0x4, offset = 0x4, fixed_abs, tag = 'smem constant byte address 0x4 - core index']
  #allocation1 [shape = 'u32[144,128]{1,0:T(1,128)}', space=vmem, size = 0x12000, scoped, tag = 'internal scratch']
  %s0 = inlined_call_operand.hbm [shape: f32[2,8,768], index: 0, kind: input, shape index: {}]
  %s1 = inlined_call_operand.hbm [shape: f32[768,768], index: 1, kind: input, shape index: {}]
  %s2 = inlined_call_operand.hbm [shape: f32[1,768], index: 2, kind: input, shape index: {}]
  %s3 = inlined_call_operand.vmem [shape: f32[2304,2], index: 3, kind: input, shape index: {}]
  %s4 = inlined_call_operand.hbm [shape: f32[1,2], index: 4, kind: input, shape index: {}]
  %s5 = inlined_call_operand.vmem [shape: f32[8,2], index: 5, kind: output, shape index: {}]
  %s6 = sld [smem:[#allocation0]]
  $region46: #{tpu_custom_call.1} parent=0
    _
  %s8 = ssub.s32 1, %s6
  %s9 = scalar_select 0, %s8, %s6
  $region1: #{tpu_custom_call.1} parent=0
    #allocation2 [shape = 'u8[49152]{0}', space=vmem, size = 0xc000, scoped, tag = 'input window, operand 0, single buffered']
    #allocation3 [shape = 's32[1]{0}', space=sflag, size = 0x4, scoped, tag = 'scoped memory for tpu_custom_call.1']
    #allocation4 [shape = 'u8[2359296]{0}', space=vmem, size = 0x240000, scoped, tag = 'input window, operand 1, single buffered']
    #allocation5 [shape = 's32[1]{0}', space=sflag, size = 0x4, scoped, tag = 'scoped memory for tpu_custom_call.1']
    #allocation6 [shape = 'u8[3072]{0}', space=vmem, size = 0xc00, scoped, tag = 'input window, operand 2, single buffered']
    #allocation7 [shape = 'u8[512]{0}', space=vmem, size = 0x400, scoped, tag = 'input window, operand 4, single buffered']
    #allocation8 [shape = 's32[1]{0}', space=sflag, size = 0x4, scoped, tag = 'scoped memory for tpu_custom_call.1']
    %10 = vsyncpa [#allocation3], 0
    %11 = vsyncpa [#allocation5], 0
    %12 = vsyncpa [#allocation8], 0
    // Predicated region
    $region2: #{tpu_custom_call.1} parent=1 // pred_check
      _
    $region3: #{tpu_custom_call.1} parent=1 // pred_check_branch
      %14 = sbr.rel (0) target = $region5
    $region4: #{tpu_custom_call.1} parent=1 // pred_region
      %s16 = ssub.s32 1536, 1536
      %17 = vsyncadd [#allocation3], %s16
      %s18 = sshll.u32 [#allocation2], 4
      %s19 = int_to_ptr.vmem [resolvable:$true] %s18
      %24 = dma.hbm_to_vmem [thread:$0]  %s0, 1536, %s19, [#allocation3], 768, 768, 48
    $region5: #{tpu_custom_call.1} parent=1 // pred_fallthru
      _
    // Predicated region
    $region6: #{tpu_custom_call.1} parent=1 // pred_check
      _
    $region7: #{tpu_custom_call.1} parent=1 // pred_check_branch
      %26 = sbr.rel (0) target = $region9
    $region8: #{tpu_custom_call.1} parent=1 // pred_region
      %s28 = ssub.s32 73728, 73728
      %29 = vsyncadd [#allocation5], %s28
      %s30 = sshll.u32 [#allocation4], 4
      %s31 = int_to_ptr.vmem [resolvable:$true] %s30
      %36 = dma.hbm_to_vmem [thread:$0]  %s1, 73728, %s31, [#allocation5], 768, 768, 48
    $region9: #{tpu_custom_call.1} parent=1 // pred_fallthru
      _
    // Predicated region
    $region10: #{tpu_custom_call.1} parent=1 // pred_check
      _
    $region11: #{tpu_custom_call.1} parent=1 // pred_check_branch
      %38 = sbr.rel (0) target = $region13
    $region12: #{tpu_custom_call.1} parent=1 // pred_region
      %s40 = ssub.s32 96, 96
      %41 = vsyncadd [#allocation5], %s40
      %s43 = sshll.u32 [#allocation6], 4
      %s44 = int_to_ptr.vmem [resolvable:$true] %s43
      %46 = dma.hbm_to_vmem [thread:$0]  %s2, 96, %s44, [#allocation5]
    $region13: #{tpu_custom_call.1} parent=1 // pred_fallthru
      _
    // Predicated region
    $region14: #{tpu_custom_call.1} parent=1 // pred_check
      _
    $region15: #{tpu_custom_call.1} parent=1 // pred_check_branch
      %48 = sbr.rel (0) target = $region17
    $region16: #{tpu_custom_call.1} parent=1 // pred_region
      _
    $region17: #{tpu_custom_call.1} parent=1 // pred_fallthru
      _
    // Predicated region
    $region18: #{tpu_custom_call.1} parent=1 // pred_check
      _
    $region19: #{tpu_custom_call.1} parent=1 // pred_check_branch
      %50 = sbr.rel (0) target = $region21
    $region20: #{tpu_custom_call.1} parent=1 // pred_region
      %s52 = ssub.s32 16, 16
      %53 = vsyncadd [#allocation8], %s52
      %s55 = sshll.u32 [#allocation7], 4
      %s56 = int_to_ptr.vmem [resolvable:$true] %s55
      %58 = dma.hbm_to_vmem [thread:$0]  %s4, 16, %s56, [#allocation8]
    $region21: #{tpu_custom_call.1} parent=1 // pred_fallthru
      _
    // Predicated region
    $region22: #{tpu_custom_call.1} parent=1 // pred_check
      _
    $region23: #{tpu_custom_call.1} parent=1 // pred_check_branch
      %60 = sbr.rel (0) target = $region25
    $region24: #{tpu_custom_call.1} parent=1 // pred_region
      %61 = dma.done [#allocation3], 1536
    $region25: #{tpu_custom_call.1} parent=1 // pred_fallthru
      _
    // Predicated region
    $region26: #{tpu_custom_call.1} parent=1 // pred_check
      _
    $region27: #{tpu_custom_call.1} parent=1 // pred_check_branch
      %63 = sbr.rel (0) target = $region29
    $region28: #{tpu_custom_call.1} parent=1 // pred_region
      %64 = dma.done [#allocation5], 73728
    $region29: #{tpu_custom_call.1} parent=1 // pred_fallthru
      _
    // Predicated region
    $region30: #{tpu_custom_call.1} parent=1 // pred_check
      _
    $region31: #{tpu_custom_call.1} parent=1 // pred_check_branch
      %66 = sbr.rel (0) target = $region33
    $region32: #{tpu_custom_call.1} parent=1 // pred_region
      %67 = dma.done [#allocation5], 96
    $region33: #{tpu_custom_call.1} parent=1 // pred_fallthru
      _
    // Predicated region
    $region34: #{tpu_custom_call.1} parent=1 // pred_check
      _
    $region35: #{tpu_custom_call.1} parent=1 // pred_check_branch
      %69 = sbr.rel (0) target = $region37
    $region36: #{tpu_custom_call.1} parent=1 // pred_region
      %70 = dma.done [#allocation8], 16
    $region37: #{tpu_custom_call.1} parent=1 // pred_fallthru
      _
    %v71 = vld [vmem:[#allocation2] sm:$0xff]
    %v72 = vld [vmem:[#allocation2 + $0x8] sm:$0xff]
    %v73 = vld [vmem:[#allocation2 + $0x10] sm:$0xff]
    %v74 = vld [vmem:[#allocation2 + $0x18] sm:$0xff]
    %v75 = vld [vmem:[#allocation2 + $0x20] sm:$0xff]
    %v76 = vld [vmem:[#allocation2 + $0x28] sm:$0xff]
    %s77 = scalar_lea.vmem [#allocation2], 48
    %v78 = vld [vmem:[%s77] sm:$0xff]
    %v79 = vld [vmem:[%s77 + $0x8] sm:$0xff]
    %v80 = vld [vmem:[%s77 + $0x10] sm:$0xff]
    %v81 = vld [vmem:[%s77 + $0x18] sm:$0xff]
    %v82 = vld [vmem:[%s77 + $0x20] sm:$0xff]
    %v83 = vld [vmem:[%s77 + $0x28] sm:$0xff]
    %v84 = vld [vmem:[#allocation4] sm:$0xff]
    %v85 = vld [vmem:[#allocation4 + $0x8] sm:$0xff]
    %v86 = vld [vmem:[#allocation4 + $0x10] sm:$0xff]
    %v87 = vld [vmem:[#allocation4 + $0x18] sm:$0xff]
    %v88 = vld [vmem:[#allocation4 + $0x20] sm:$0xff]
    %v89 = vld [vmem:[#allocation4 + $0x28] sm:$0xff]
    %v90 = vld [vmem:[#allocation4 + $0x30] sm:$0xff]
    %v91 = vld [vmem:[#allocation4 + $0x38] sm:$0xff]
    %v92 = vld [vmem:[#allocation4 + $0x40] sm:$0xff]
    %v93 = vld [vmem:[#allocation4 + $0x48] sm:$0xff]
    %v94 = vld [vmem:[#allocation4 + $0x50] sm:$0xff]
    %v95 = vld [vmem:[#allocation4 + $0x58] sm:$0xff]
    %v96 = vld [vmem:[#allocation4 + $0x60] sm:$0xff]
    %v97 = vld [vmem:[#allocation4 + $0x68] sm:$0xff]
    %v98 = vld [vmem:[#allocation4 + $0x70] sm:$0xff]
    %v99 = vld [vmem:[#allocation4 + $0x78] sm:$0xff]
    %v100 = vld [vmem:[#allocation4 + $0x80] sm:$0xff]
    %v101 = vld [vmem:[#allocation4 + $0x88] sm:$0xff]
    %v102 = vld [vmem:[#allocation4 + $0x90] sm:$0xff]
    %v103 = vld [vmem:[#allocation4 + $0x98] sm:$0xff]
    %v104 = vld [vmem:[#allocation4 + $0xa0] sm:$0xff]
    %v105 = vld [vmem:[#allocation4 + $0xa8] sm:$0xff]
    %v106 = vld [vmem:[#allocation4 + $0xb0] sm:$0xff]
    %v107 = vld [vmem:[#allocation4 + $0xb8] sm:$0xff]
    %v108 = vld [vmem:[#allocation4 + $0xc0] sm:$0xff]
    %v109 = vld [vmem:[#allocation4 + $0xc8] sm:$0xff]
    %v110 = vld [vmem:[#allocation4 + $0xd0] sm:$0xff]
    %v111 = vld [vmem:[#allocation4 + $0xd8] sm:$0xff]
    %v112 = vld [vmem:[#allocation4 + $0xe0] sm:$0xff]
    %v113 = vld [vmem:[#allocation4 + $0xe8] sm:$0xff]
    %v114 = vld [vmem:[#allocation4 + $0xf0] sm:$0xff]
    %v115 = vld [vmem:[#allocation4 + $0xf8] sm:$0xff]
    %v116 = vld [vmem:[#allocation4 + $0x100] sm:$0xff]
    %v117 = vld [vmem:[#allocation4 + $0x108] sm:$0xff]
    %v118 = vld [vmem:[#allocation4 + $0x110] sm:$0xff]
    %v119 = vld [vmem:[#allocation4 + $0x118] sm:$0xff]
    %v120 = vld [vmem:[#allocation4 + $0x120] sm:$0xff]
    %v121 = vld [vmem:[#allocation4 + $0x128] sm:$0xff]
    %v122 = vld [vmem:[#allocation4 + $0x130] sm:$0xff]
    %v123 = vld [vmem:[#allocation4 + $0x138] sm:$0xff]
    %v124 = vld [vmem:[#allocation4 + $0x140] sm:$0xff]
    %v125 = vld [vmem:[#allocation4 + $0x148] sm:$0xff]
    %v126 = vld [vmem:[#allocation4 + $0x150] sm:$0xff]
    %v127 = vld [vmem:[#allocation4 + $0x158] sm:$0xff]
    %v128 = vld [vmem:[#allocation4 + $0x160] sm:$0xff]
    %v129 = vld [vmem:[#allocation4 + $0x168] sm:$0xff]
    %v130 = vld [vmem:[#allocation4 + $0x170] sm:$0xff]
    %v131 = vld [vmem:[#allocation4 + $0x178] sm:$0xff]
    %v132 = vld [vmem:[#allocation4 + $0x180] sm:$0xff]
    %v133 = vld [vmem:[#allocation4 + $0x188] sm:$0xff]
    %v134 = vld [vmem:[#allocation4 + $0x190] sm:$0xff]
    %v135 = vld [vmem:[#allocation4 + $0x198] sm:$0xff]
    %v136 = vld [vmem:[#allocation4 + $0x1a0] sm:$0xff]
    %v137 = vld [vmem:[#allocation4 + $0x1a8] sm:$0xff]
    %v138 = vld [vmem:[#allocation4 + $0x1b0] sm:$0xff]
    %v139 = vld [vmem:[#allocation4 + $0x1b8] sm:$0xff]
    %v140 = vld [vmem:[#allocation4 + $0x1c0] sm:$0xff]
    %v141 = vld [vmem:[#allocation4 + $0x1c8] sm:$0xff]
    %v142 = vld [vmem:[#allocation4 + $0x1d0] sm:$0xff]
    %v143 = vld [vmem:[#allocation4 + $0x1d8] sm:$0xff]
    %v144 = vld [vmem:[#allocation4 + $0x1e0] sm:$0xff]
    %v145 = vld [vmem:[#allocation4 + $0x1e8] sm:$0xff]
    %v146 = vld [vmem:[#allocation4 + $0x1f0] sm:$0xff]
    %v147 = vld [vmem:[#allocation4 + $0x1f8] sm:$0xff]
    %v148 = vld [vmem:[#allocation4 + $0x200] sm:$0xff]
    %v149 = vld [vmem:[#allocation4 + $0x208] sm:$0xff]
    %v150 = vld [vmem:[#allocation4 + $0x210] sm:$0xff]
    %v151 = vld [vmem:[#allocation4 + $0x218] sm:$0xff]
    %v152 = vld [vmem:[#allocation4 + $0x220] sm:$0xff]
    %v153 = vld [vmem:[#allocation4 + $0x228] sm:$0xff]
    %v154 = vld [vmem:[#allocation4 + $0x230] sm:$0xff]
    %v155 = vld [vmem:[#allocation4 + $0x238] sm:$0xff]
    %v156 = vld [vmem:[#allocation4 + $0x240] sm:$0xff]
    %v157 = vld [vmem:[#allocation4 + $0x248] sm:$0xff]
    %v158 = vld [vmem:[#allocation4 + $0x250] sm:$0xff]
    %v159 = vld [vmem:[#allocation4 + $0x258] sm:$0xff]
    %v160 = vld [vmem:[#allocation4 + $0x260] sm:$0xff]
    %v161 = vld [vmem:[#allocation4 + $0x268] sm:$0xff]
    %v162 = vld [vmem:[#allocation4 + $0x270] sm:$0xff]
    %v163 = vld [vmem:[#allocation4 + $0x278] sm:$0xff]
    %v164 = vld [vmem:[#allocation4 + $0x280] sm:$0xff]
    %v165 = vld [vmem:[#allocation4 + $0x288] sm:$0xff]
    %v166 = vld [vmem:[#allocation4 + $0x290] sm:$0xff]
    %v167 = vld [vmem:[#allocation4 + $0x298] sm:$0xff]
    %v168 = vld [vmem:[#allocation4 + $0x2a0] sm:$0xff]
    %v169 = vld [vmem:[#allocation4 + $0x2a8] sm:$0xff]
    %v170 = vld [vmem:[#allocation4 + $0x2b0] sm:$0xff]
    %v171 = vld [vmem:[#allocation4 + $0x2b8] sm:$0xff]
    %v172 = vld [vmem:[#allocation4 + $0x2c0] sm:$0xff]
    %v173 = vld [vmem:[#allocation4 + $0x2c8] sm:$0xff]
    %v174 = vld [vmem:[#allocation4 + $0x2d0] sm:$0xff]
    %v175 = vld [vmem:[#allocation4 + $0x2d8] sm:$0xff]
    %v176 = vld [vmem:[#allocation4 + $0x2e0] sm:$0xff]
    %v177 = vld [vmem:[#allocation4 + $0x2e8] sm:$0xff]
    %v178 = vld [vmem:[#allocation4 + $0x2f0] sm:$0xff]
    %v179 = vld [vmem:[#allocation4 + $0x2f8] sm:$0xff]
    %v180 = vld [vmem:[#allocation4 + $0x300] sm:$0xff]
    %v181 = vld [vmem:[#allocation4 + $0x308] sm:$0xff]
    %v182 = vld [vmem:[#allocation4 + $0x310] sm:$0xff]
    %v183 = vld [vmem:[#allocation4 + $0x318] sm:$0xff]
    %v184 = vld [vmem:[#allocation4 + $0x320] sm:$0xff]
    %v185 = vld [vmem:[#allocation4 + $0x328] sm:$0xff]
    %v186 = vld [vmem:[#allocation4 + $0x330] sm:$0xff]
    %v187 = vld [vmem:[#allocation4 + $0x338] sm:$0xff]
    %v188 = vld [vmem:[#allocation4 + $0x340] sm:$0xff]
    %v189 = vld [vmem:[#allocation4 + $0x348] sm:$0xff]
    %v190 = vld [vmem:[#allocation4 + $0x350] sm:$0xff]
    %v191 = vld [vmem:[#allocation4 + $0x358] sm:$0xff]
    %v192 = vld [vmem:[#allocation4 + $0x360] sm:$0xff]
    %v193 = vld [vmem:[#allocation4 + $0x368] sm:$0xff]
    %v194 = vld [vmem:[#allocation4 + $0x370] sm:$0xff]
    %v195 = vld [vmem:[#allocation4 + $0x378] sm:$0xff]
    %v196 = vld [vmem:[#allocation4 + $0x380] sm:$0xff]
    %v197 = vld [vmem:[#allocation4 + $0x388] sm:$0xff]
    %v198 = vld [vmem:[#allocation4 + $0x390] sm:$0xff]
    %v199 = vld [vmem:[#allocation4 + $0x398] sm:$0xff]
    %v200 = vld [vmem:[#allocation4 + $0x3a0] sm:$0xff]
    %v201 = vld [vmem:[#allocation4 + $0x3a8] sm:$0xff]
    %v202 = vld [vmem:[#allocation4 + $0x3b0] sm:$0xff]
    %v203 = vld [vmem:[#allocation4 + $0x3b8] sm:$0xff]
    %v204 = vld [vmem:[#allocation4 + $0x3c0] sm:$0xff]
    %v205 = vld [vmem:[#allocation4 + $0x3c8] sm:$0xff]
    %v206 = vld [vmem:[#allocation4 + $0x3d0] sm:$0xff]
    %v207 = vld [vmem:[#allocation4 + $0x3d8] sm:$0xff]
    %v208 = vld [vmem:[#allocation4 + $0x3e0] sm:$0xff]
    %v209 = vld [vmem:[#allocation4 + $0x3e8] sm:$0xff]
    %v210 = vld [vmem:[#allocation4 + $0x3f0] sm:$0xff]
    %v211 = vld [vmem:[#allocation4 + $0x3f8] sm:$0xff]
    %v212 = vld [vmem:[#allocation4 + $0x400] sm:$0xff]
    %v213 = vld [vmem:[#allocation4 + $0x408] sm:$0xff]
    %v214 = vld [vmem:[#allocation4 + $0x410] sm:$0xff]
    %v215 = vld [vmem:[#allocation4 + $0x418] sm:$0xff]
    %v216 = vld [vmem:[#allocation4 + $0x420] sm:$0xff]
    %v217 = vld [vmem:[#allocation4 + $0x428] sm:$0xff]
    %v218 = vld [vmem:[#allocation4 + $0x430] sm:$0xff]
    %v219 = vld [vmem:[#allocation4 + $0x438] sm:$0xff]
    %v220 = vld [vmem:[#allocation4 + $0x440] sm:$0xff]
    %v221 = vld [vmem:[#allocation4 + $0x448] sm:$0xff]
    %v222 = vld [vmem:[#allocation4 + $0x450] sm:$0xff]
    %v223 = vld [vmem:[#allocation4 + $0x458] sm:$0xff]
    %v224 = vld [vmem:[#allocation4 + $0x460] sm:$0xff]
    %v225 = vld [vmem:[#allocation4 + $0x468] sm:$0xff]
    %v226 = vld [vmem:[#allocation4 + $0x470] sm:$0xff]
    %v227 = vld [vmem:[#allocation4 + $0x478] sm:$0xff]
    %v228 = vld [vmem:[#allocation4 + $0x480] sm:$0xff]
    %v229 = vld [vmem:[#allocation4 + $0x488] sm:$0xff]
    %v230 = vld [vmem:[#allocation4 + $0x490] sm:$0xff]
    %v231 = vld [vmem:[#allocation4 + $0x498] sm:$0xff]
    %v232 = vld [vmem:[#allocation4 + $0x4a0] sm:$0xff]
    %v233 = vld [vmem:[#allocation4 + $0x4a8] sm:$0xff]
    %v234 = vld [vmem:[#allocation4 + $0x4b0] sm:$0xff]
    %v235 = vld [vmem:[#allocation4 + $0x4b8] sm:$0xff]
    %v236 = vld [vmem:[#allocation4 + $0x4c0] sm:$0xff]
    %v237 = vld [vmem:[#allocation4 + $0x4c8] sm:$0xff]
    %v238 = vld [vmem:[#allocation4 + $0x4d0] sm:$0xff]
    %v239 = vld [vmem:[#allocation4 + $0x4d8] sm:$0xff]
    %v240 = vld [vmem:[#allocation4 + $0x4e0] sm:$0xff]
    %v241 = vld [vmem:[#allocation4 + $0x4e8] sm:$0xff]
    %v242 = vld [vmem:[#allocation4 + $0x4f0] sm:$0xff]
    %v243 = vld [vmem:[#allocation4 + $0x4f8] sm:$0xff]
    %v244 = vld [vmem:[#allocation4 + $0x500] sm:$0xff]
    %v245 = vld [vmem:[#allocation4 + $0x508] sm:$0xff]
    %v246 = vld [vmem:[#allocation4 + $0x510] sm:$0xff]
    %v247 = vld [vmem:[#allocation4 + $0x518] sm:$0xff]
    %v248 = vld [vmem:[#allocation4 + $0x520] sm:$0xff]
    %v249 = vld [vmem:[#allocation4 + $0x528] sm:$0xff]
    %v250 = vld [vmem:[#allocation4 + $0x530] sm:$0xff]
    %v251 = vld [vmem:[#allocation4 + $0x538] sm:$0xff]
    %v252 = vld [vmem:[#allocation4 + $0x540] sm:$0xff]
    %v253 = vld [vmem:[#allocation4 + $0x548] sm:$0xff]
    %v254 = vld [vmem:[#allocation4 + $0x550] sm:$0xff]
    %v255 = vld [vmem:[#allocation4 + $0x558] sm:$0xff]
    %v256 = vld [vmem:[#allocation4 + $0x560] sm:$0xff]
    %v257 = vld [vmem:[#allocation4 + $0x568] sm:$0xff]
    %v258 = vld [vmem:[#allocation4 + $0x570] sm:$0xff]
    %v259 = vld [vmem:[#allocation4 + $0x578] sm:$0xff]
    %v260 = vld [vmem:[#allocation4 + $0x580] sm:$0xff]
    %v261 = vld [vmem:[#allocation4 + $0x588] sm:$0xff]
    %v262 = vld [vmem:[#allocation4 + $0x590] sm:$0xff]
    %v263 = vld [vmem:[#allocation4 + $0x598] sm:$0xff]
    %v264 = vld [vmem:[#allocation4 + $0x5a0] sm:$0xff]
    %v265 = vld [vmem:[#allocation4 + $0x5a8] sm:$0xff]
    %v266 = vld [vmem:[#allocation4 + $0x5b0] sm:$0xff]
    %v267 = vld [vmem:[#allocation4 + $0x5b8] sm:$0xff]
    %v268 = vld [vmem:[#allocation4 + $0x5c0] sm:$0xff]
    %v269 = vld [vmem:[#allocation4 + $0x5c8] sm:$0xff]
    %v270 = vld [vmem:[#allocation4 + $0x5d0] sm:$0xff]
    %v271 = vld [vmem:[#allocation4 + $0x5d8] sm:$0xff]
    %v272 = vld [vmem:[#allocation4 + $0x5e0] sm:$0xff]
    %v273 = vld [vmem:[#allocation4 + $0x5e8] sm:$0xff]
    %v274 = vld [vmem:[#allocation4 + $0x5f0] sm:$0xff]
    %v275 = vld [vmem:[#allocation4 + $0x5f8] sm:$0xff]
    %v276 = vld [vmem:[#allocation4 + $0x600] sm:$0xff]
    %v277 = vld [vmem:[#allocation4 + $0x608] sm:$0xff]
    %v278 = vld [vmem:[#allocation4 + $0x610] sm:$0xff]
    %v279 = vld [vmem:[#allocation4 + $0x618] sm:$0xff]
    %v280 = vld [vmem:[#allocation4 + $0x620] sm:$0xff]
    %v281 = vld [vmem:[#allocation4 + $0x628] sm:$0xff]
    %v282 = vld [vmem:[#allocation4 + $0x630] sm:$0xff]
    %v283 = vld [vmem:[#allocation4 + $0x638] sm:$0xff]
    %v284 = vld [vmem:[#allocation4 + $0x640] sm:$0xff]
    %v285 = vld [vmem:[#allocation4 + $0x648] sm:$0xff]
    %v286 = vld [vmem:[#allocation4 + $0x650] sm:$0xff]
    %v287 = vld [vmem:[#allocation4 + $0x658] sm:$0xff]
    %v288 = vld [vmem:[#allocation4 + $0x660] sm:$0xff]
    %v289 = vld [vmem:[#allocation4 + $0x668] sm:$0xff]
    %v290 = vld [vmem:[#allocation4 + $0x670] sm:$0xff]
    %v291 = vld [vmem:[#allocation4 + $0x678] sm:$0xff]
    %v292 = vld [vmem:[#allocation4 + $0x680] sm:$0xff]
    %v293 = vld [vmem:[#allocation4 + $0x688] sm:$0xff]
    %v294 = vld [vmem:[#allocation4 + $0x690] sm:$0xff]
    %v295 = vld [vmem:[#allocation4 + $0x698] sm:$0xff]
    %v296 = vld [vmem:[#allocation4 + $0x6a0] sm:$0xff]
    %v297 = vld [vmem:[#allocation4 + $0x6a8] sm:$0xff]
    %v298 = vld [vmem:[#allocation4 + $0x6b0] sm:$0xff]
    %v299 = vld [vmem:[#allocation4 + $0x6b8] sm:$0xff]
    %v300 = vld [vmem:[#allocation4 + $0x6c0] sm:$0xff]
    %v301 = vld [vmem:[#allocation4 + $0x6c8] sm:$0xff]
    %v302 = vld [vmem:[#allocation4 + $0x6d0] sm:$0xff]
    %v303 = vld [vmem:[#allocation4 + $0x6d8] sm:$0xff]
    %v304 = vld [vmem:[#allocation4 + $0x6e0] sm:$0xff]
    %v305 = vld [vmem:[#allocation4 + $0x6e8] sm:$0xff]
    %v306 = vld [vmem:[#allocation4 + $0x6f0] sm:$0xff]
    %v307 = vld [vmem:[#allocation4 + $0x6f8] sm:$0xff]
    %v308 = vld [vmem:[#allocation4 + $0x700] sm:$0xff]
    %v309 = vld [vmem:[#allocation4 + $0x708] sm:$0xff]
    %v310 = vld [vmem:[#allocation4 + $0x710] sm:$0xff]
    %v311 = vld [vmem:[#allocation4 + $0x718] sm:$0xff]
    %v312 = vld [vmem:[#allocation4 + $0x720] sm:$0xff]
    %v313 = vld [vmem:[#allocation4 + $0x728] sm:$0xff]
    %v314 = vld [vmem:[#allocation4 + $0x730] sm:$0xff]
    %v315 = vld [vmem:[#allocation4 + $0x738] sm:$0xff]
    %v316 = vld [vmem:[#allocation4 + $0x740] sm:$0xff]
    %v317 = vld [vmem:[#allocation4 + $0x748] sm:$0xff]
    %v318 = vld [vmem:[#allocation4 + $0x750] sm:$0xff]
    %v319 = vld [vmem:[#allocation4 + $0x758] sm:$0xff]
    %v320 = vld [vmem:[#allocation4 + $0x760] sm:$0xff]
    %v321 = vld [vmem:[#allocation4 + $0x768] sm:$0xff]
    %v322 = vld [vmem:[#allocation4 + $0x770] sm:$0xff]
    %v323 = vld [vmem:[#allocation4 + $0x778] sm:$0xff]
    %v324 = vld [vmem:[#allocation4 + $0x780] sm:$0xff]
    %v325 = vld [vmem:[#allocation4 + $0x788] sm:$0xff]
    %v326 = vld [vmem:[#allocation4 + $0x790] sm:$0xff]
    %v327 = vld [vmem:[#allocation4 + $0x798] sm:$0xff]
    %v328 = vld [vmem:[#allocation4 + $0x7a0] sm:$0xff]
    %v329 = vld [vmem:[#allocation4 + $0x7a8] sm:$0xff]
    %v330 = vld [vmem:[#allocation4 + $0x7b0] sm:$0xff]
    %v331 = vld [vmem:[#allocation4 + $0x7b8] sm:$0xff]
    %v332 = vld [vmem:[#allocation4 + $0x7c0] sm:$0xff]
    %v333 = vld [vmem:[#allocation4 + $0x7c8] sm:$0xff]
    %v334 = vld [vmem:[#allocation4 + $0x7d0] sm:$0xff]
    %v335 = vld [vmem:[#allocation4 + $0x7d8] sm:$0xff]
    %v336 = vld [vmem:[#allocation4 + $0x7e0] sm:$0xff]
    %v337 = vld [vmem:[#allocation4 + $0x7e8] sm:$0xff]
    %v338 = vld [vmem:[#allocation4 + $0x7f0] sm:$0xff]
    %v339 = vld [vmem:[#allocation4 + $0x7f8] sm:$0xff]
    %v340 = vld [vmem:[#allocation4 + $0x800] sm:$0xff]
    %v341 = vld [vmem:[#allocation4 + $0x808] sm:$0xff]
    %v342 = vld [vmem:[#allocation4 + $0x810] sm:$0xff]
    %v343 = vld [vmem:[#allocation4 + $0x818] sm:$0xff]
    %v344 = vld [vmem:[#allocation4 + $0x820] sm:$0xff]
    %v345 = vld [vmem:[#allocation4 + $0x828] sm:$0xff]
    %v346 = vld [vmem:[#allocation4 + $0x830] sm:$0xff]
    %v347 = vld [vmem:[#allocation4 + $0x838] sm:$0xff]
    %v348 = vld [vmem:[#allocation4 + $0x840] sm:$0xff]
    %v349 = vld [vmem:[#allocation4 + $0x848] sm:$0xff]
    %v350 = vld [vmem:[#allocation4 + $0x850] sm:$0xff]
    %v351 = vld [vmem:[#allocation4 + $0x858] sm:$0xff]
    %v352 = vld [vmem:[#allocation4 + $0x860] sm:$0xff]
    %v353 = vld [vmem:[#allocation4 + $0x868] sm:$0xff]
    %v354 = vld [vmem:[#allocation4 + $0x870] sm:$0xff]
    %v355 = vld [vmem:[#allocation4 + $0x878] sm:$0xff]
    %v356 = vld [vmem:[#allocation4 + $0x880] sm:$0xff]
    %v357 = vld [vmem:[#allocation4 + $0x888] sm:$0xff]
    %v358 = vld [vmem:[#allocation4 + $0x890] sm:$0xff]
    %v359 = vld [vmem:[#allocation4 + $0x898] sm:$0xff]
    %v360 = vld [vmem:[#allocation4 + $0x8a0] sm:$0xff]
    %v361 = vld [vmem:[#allocation4 + $0x8a8] sm:$0xff]
    %v362 = vld [vmem:[#allocation4 + $0x8b0] sm:$0xff]
    %v363 = vld [vmem:[#allocation4 + $0x8b8] sm:$0xff]
    %v364 = vld [vmem:[#allocation4 + $0x8c0] sm:$0xff]
    %v365 = vld [vmem:[#allocation4 + $0x8c8] sm:$0xff]
    %v366 = vld [vmem:[#allocation4 + $0x8d0] sm:$0xff]
    %v367 = vld [vmem:[#allocation4 + $0x8d8] sm:$0xff]
    %v368 = vld [vmem:[#allocation4 + $0x8e0] sm:$0xff]
    %v369 = vld [vmem:[#allocation4 + $0x8e8] sm:$0xff]
    %v370 = vld [vmem:[#allocation4 + $0x8f0] sm:$0xff]
    %v371 = vld [vmem:[#allocation4 + $0x8f8] sm:$0xff]
    %v372 = vld [vmem:[#allocation4 + $0x900] sm:$0xff]
    %v373 = vld [vmem:[#allocation4 + $0x908] sm:$0xff]
    %v374 = vld [vmem:[#allocation4 + $0x910] sm:$0xff]
    %v375 = vld [vmem:[#allocation4 + $0x918] sm:$0xff]
    %v376 = vld [vmem:[#allocation4 + $0x920] sm:$0xff]
    %v377 = vld [vmem:[#allocation4 + $0x928] sm:$0xff]
    %v378 = vld [vmem:[#allocation4 + $0x930] sm:$0xff]
    %v379 = vld [vmem:[#allocation4 + $0x938] sm:$0xff]
    %v380 = vld [vmem:[#allocation4 + $0x940] sm:$0xff]
    %v381 = vld [vmem:[#allocation4 + $0x948] sm:$0xff]
    %v382 = vld [vmem:[#allocation4 + $0x950] sm:$0xff]
    %v383 = vld [vmem:[#allocation4 + $0x958] sm:$0xff]
    %v384 = vld [vmem:[#allocation4 + $0x960] sm:$0xff]
    %v385 = vld [vmem:[#allocation4 + $0x968] sm:$0xff]
    %v386 = vld [vmem:[#allocation4 + $0x970] sm:$0xff]
    %v387 = vld [vmem:[#allocation4 + $0x978] sm:$0xff]
    %v388 = vld [vmem:[#allocation4 + $0x980] sm:$0xff]
    %v389 = vld [vmem:[#allocation4 + $0x988] sm:$0xff]
    %v390 = vld [vmem:[#allocation4 + $0x990] sm:$0xff]
    %v391 = vld [vmem:[#allocation4 + $0x998] sm:$0xff]
    %v392 = vld [vmem:[#allocation4 + $0x9a0] sm:$0xff]
    %v393 = vld [vmem:[#allocation4 + $0x9a8] sm:$0xff]
    %v394 = vld [vmem:[#allocation4 + $0x9b0] sm:$0xff]
    %v395 = vld [vmem:[#allocation4 + $0x9b8] sm:$0xff]
    %v396 = vld [vmem:[#allocation4 + $0x9c0] sm:$0xff]
    %v397 = vld [vmem:[#allocation4 + $0x9c8] sm:$0xff]
    %v398 = vld [vmem:[#allocation4 + $0x9d0] sm:$0xff]
    %v399 = vld [vmem:[#allocation4 + $0x9d8] sm:$0xff]
    %v400 = vld [vmem:[#allocation4 + $0x9e0] sm:$0xff]
    %v401 = vld [vmem:[#allocation4 + $0x9e8] sm:$0xff]
    %v402 = vld [vmem:[#allocation4 + $0x9f0] sm:$0xff]
    %v403 = vld [vmem:[#allocation4 + $0x9f8] sm:$0xff]
    %v404 = vld [vmem:[#allocation4 + $0xa00] sm:$0xff]
    %v405 = vld [vmem:[#allocation4 + $0xa08] sm:$0xff]
    %v406 = vld [vmem:[#allocation4 + $0xa10] sm:$0xff]
    %v407 = vld [vmem:[#allocation4 + $0xa18] sm:$0xff]
    %v408 = vld [vmem:[#allocation4 + $0xa20] sm:$0xff]
    %v409 = vld [vmem:[#allocation4 + $0xa28] sm:$0xff]
    %v410 = vld [vmem:[#allocation4 + $0xa30] sm:$0xff]
    %v411 = vld [vmem:[#allocation4 + $0xa38] sm:$0xff]
    %v412 = vld [vmem:[#allocation4 + $0xa40] sm:$0xff]
    %v413 = vld [vmem:[#allocation4 + $0xa48] sm:$0xff]
    %v414 = vld [vmem:[#allocation4 + $0xa50] sm:$0xff]
    %v415 = vld [vmem:[#allocation4 + $0xa58] sm:$0xff]
    %v416 = vld [vmem:[#allocation4 + $0xa60] sm:$0xff]
    %v417 = vld [vmem:[#allocation4 + $0xa68] sm:$0xff]
    %v418 = vld [vmem:[#allocation4 + $0xa70] sm:$0xff]
    %v419 = vld [vmem:[#allocation4 + $0xa78] sm:$0xff]
    %v420 = vld [vmem:[#allocation4 + $0xa80] sm:$0xff]
    %v421 = vld [vmem:[#allocation4 + $0xa88] sm:$0xff]
    %v422 = vld [vmem:[#allocation4 + $0xa90] sm:$0xff]
    %v423 = vld [vmem:[#allocation4 + $0xa98] sm:$0xff]
    %v424 = vld [vmem:[#allocation4 + $0xaa0] sm:$0xff]
    %v425 = vld [vmem:[#allocation4 + $0xaa8] sm:$0xff]
    %v426 = vld [vmem:[#allocation4 + $0xab0] sm:$0xff]
    %v427 = vld [vmem:[#allocation4 + $0xab8] sm:$0xff]
    %v428 = vld [vmem:[#allocation4 + $0xac0] sm:$0xff]
    %v429 = vld [vmem:[#allocation4 + $0xac8] sm:$0xff]
    %v430 = vld [vmem:[#allocation4 + $0xad0] sm:$0xff]
    %v431 = vld [vmem:[#allocation4 + $0xad8] sm:$0xff]
    %v432 = vld [vmem:[#allocation4 + $0xae0] sm:$0xff]
    %v433 = vld [vmem:[#allocation4 + $0xae8] sm:$0xff]
    %v434 = vld [vmem:[#allocation4 + $0xaf0] sm:$0xff]
    %v435 = vld [vmem:[#allocation4 + $0xaf8] sm:$0xff]
    %v436 = vld [vmem:[#allocation4 + $0xb00] sm:$0xff]
    %v437 = vld [vmem:[#allocation4 + $0xb08] sm:$0xff]
    %v438 = vld [vmem:[#allocation4 + $0xb10] sm:$0xff]
    %v439 = vld [vmem:[#allocation4 + $0xb18] sm:$0xff]
    %v440 = vld [vmem:[#allocation4 + $0xb20] sm:$0xff]
    %v441 = vld [vmem:[#allocation4 + $0xb28] sm:$0xff]
    %v442 = vld [vmem:[#allocation4 + $0xb30] sm:$0xff]
    %v443 = vld [vmem:[#allocation4 + $0xb38] sm:$0xff]
    %v444 = vld [vmem:[#allocation4 + $0xb40] sm:$0xff]
    %v445 = vld [vmem:[#allocation4 + $0xb48] sm:$0xff]
    %v446 = vld [vmem:[#allocation4 + $0xb50] sm:$0xff]
    %v447 = vld [vmem:[#allocation4 + $0xb58] sm:$0xff]
    %v448 = vld [vmem:[#allocation4 + $0xb60] sm:$0xff]
    %v449 = vld [vmem:[#allocation4 + $0xb68] sm:$0xff]
    %v450 = vld [vmem:[#allocation4 + $0xb70] sm:$0xff]
    %v451 = vld [vmem:[#allocation4 + $0xb78] sm:$0xff]
    %v452 = vld [vmem:[#allocation4 + $0xb80] sm:$0xff]
    %v453 = vld [vmem:[#allocation4 + $0xb88] sm:$0xff]
    %v454 = vld [vmem:[#allocation4 + $0xb90] sm:$0xff]
    %v455 = vld [vmem:[#allocation4 + $0xb98] sm:$0xff]
    %v456 = vld [vmem:[#allocation4 + $0xba0] sm:$0xff]
    %v457 = vld [vmem:[#allocation4 + $0xba8] sm:$0xff]
    %v458 = vld [vmem:[#allocation4 + $0xbb0] sm:$0xff]
    %v459 = vld [vmem:[#allocation4 + $0xbb8] sm:$0xff]
    %v460 = vld [vmem:[#allocation4 + $0xbc0] sm:$0xff]
    %v461 = vld [vmem:[#allocation4 + $0xbc8] sm:$0xff]
    %v462 = vld [vmem:[#allocation4 + $0xbd0] sm:$0xff]
    %v463 = vld [vmem:[#allocation4 + $0xbd8] sm:$0xff]
    %v464 = vld [vmem:[#allocation4 + $0xbe0] sm:$0xff]
    %v465 = vld [vmem:[#allocation4 + $0xbe8] sm:$0xff]
    %v466 = vld [vmem:[#allocation4 + $0xbf0] sm:$0xff]
    %v467 = vld [vmem:[#allocation4 + $0xbf8] sm:$0xff]
    %v468 = vld [vmem:[#allocation4 + $0xc00] sm:$0xff]
    %v469 = vld [vmem:[#allocation4 + $0xc08] sm:$0xff]
    %v470 = vld [vmem:[#allocation4 + $0xc10] sm:$0xff]
    %v471 = vld [vmem:[#allocation4 + $0xc18] sm:$0xff]
    %v472 = vld [vmem:[#allocation4 + $0xc20] sm:$0xff]
    %v473 = vld [vmem:[#allocation4 + $0xc28] sm:$0xff]
    %v474 = vld [vmem:[#allocation4 + $0xc30] sm:$0xff]
    %v475 = vld [vmem:[#allocation4 + $0xc38] sm:$0xff]
    %v476 = vld [vmem:[#allocation4 + $0xc40] sm:$0xff]
    %v477 = vld [vmem:[#allocation4 + $0xc48] sm:$0xff]
    %v478 = vld [vmem:[#allocation4 + $0xc50] sm:$0xff]
    %v479 = vld [vmem:[#allocation4 + $0xc58] sm:$0xff]
    %v480 = vld [vmem:[#allocation4 + $0xc60] sm:$0xff]
    %v481 = vld [vmem:[#allocation4 + $0xc68] sm:$0xff]
    %v482 = vld [vmem:[#allocation4 + $0xc70] sm:$0xff]
    %v483 = vld [vmem:[#allocation4 + $0xc78] sm:$0xff]
    %v484 = vld [vmem:[#allocation4 + $0xc80] sm:$0xff]
    %v485 = vld [vmem:[#allocation4 + $0xc88] sm:$0xff]
    %v486 = vld [vmem:[#allocation4 + $0xc90] sm:$0xff]
    %v487 = vld [vmem:[#allocation4 + $0xc98] sm:$0xff]
    %v488 = vld [vmem:[#allocation4 + $0xca0] sm:$0xff]
    %v489 = vld [vmem:[#allocation4 + $0xca8] sm:$0xff]
    %v490 = vld [vmem:[#allocation4 + $0xcb0] sm:$0xff]
    %v491 = vld [vmem:[#allocation4 + $0xcb8] sm:$0xff]
    %v492 = vld [vmem:[#allocation4 + $0xcc0] sm:$0xff]
    %v493 = vld [vmem:[#allocation4 + $0xcc8] sm:$0xff]
    %v494 = vld [vmem:[#allocation4 + $0xcd0] sm:$0xff]
    %v495 = vld [vmem:[#allocation4 + $0xcd8] sm:$0xff]
    %v496 = vld [vmem:[#allocation4 + $0xce0] sm:$0xff]
    %v497 = vld [vmem:[#allocation4 + $0xce8] sm:$0xff]
    %v498 = vld [vmem:[#allocation4 + $0xcf0] sm:$0xff]
    %v499 = vld [vmem:[#allocation4 + $0xcf8] sm:$0xff]
    %v500 = vld [vmem:[#allocation4 + $0xd00] sm:$0xff]
    %v501 = vld [vmem:[#allocation4 + $0xd08] sm:$0xff]
    %v502 = vld [vmem:[#allocation4 + $0xd10] sm:$0xff]
    %v503 = vld [vmem:[#allocation4 + $0xd18] sm:$0xff]
    %v504 = vld [vmem:[#allocation4 + $0xd20] sm:$0xff]
    %v505 = vld [vmem:[#allocation4 + $0xd28] sm:$0xff]
    %v506 = vld [vmem:[#allocation4 + $0xd30] sm:$0xff]
    %v507 = vld [vmem:[#allocation4 + $0xd38] sm:$0xff]
    %v508 = vld [vmem:[#allocation4 + $0xd40] sm:$0xff]
    %v509 = vld [vmem:[#allocation4 + $0xd48] sm:$0xff]
    %v510 = vld [vmem:[#allocation4 + $0xd50] sm:$0xff]
    %v511 = vld [vmem:[#allocation4 + $0xd58] sm:$0xff]
    %v512 = vld [vmem:[#allocation4 + $0xd60] sm:$0xff]
    %v513 = vld [vmem:[#allocation4 + $0xd68] sm:$0xff]
    %v514 = vld [vmem:[#allocation4 + $0xd70] sm:$0xff]
    %v515 = vld [vmem:[#allocation4 + $0xd78] sm:$0xff]
    %v516 = vld [vmem:[#allocation4 + $0xd80] sm:$0xff]
    %v517 = vld [vmem:[#allocation4 + $0xd88] sm:$0xff]
    %v518 = vld [vmem:[#allocation4 + $0xd90] sm:$0xff]
    %v519 = vld [vmem:[#allocation4 + $0xd98] sm:$0xff]
    %v520 = vld [vmem:[#allocation4 + $0xda0] sm:$0xff]
    %v521 = vld [vmem:[#allocation4 + $0xda8] sm:$0xff]
    %v522 = vld [vmem:[#allocation4 + $0xdb0] sm:$0xff]
    %v523 = vld [vmem:[#allocation4 + $0xdb8] sm:$0xff]
    %v524 = vld [vmem:[#allocation4 + $0xdc0] sm:$0xff]
    %v525 = vld [vmem:[#allocation4 + $0xdc8] sm:$0xff]
    %v526 = vld [vmem:[#allocation4 + $0xdd0] sm:$0xff]
    %v527 = vld [vmem:[#allocation4 + $0xdd8] sm:$0xff]
    %v528 = vld [vmem:[#allocation4 + $0xde0] sm:$0xff]
    %v529 = vld [vmem:[#allocation4 + $0xde8] sm:$0xff]
    %v530 = vld [vmem:[#allocation4 + $0xdf0] sm:$0xff]
    %v531 = vld [vmem:[#allocation4 + $0xdf8] sm:$0xff]
    %v532 = vld [vmem:[#allocation4 + $0xe00] sm:$0xff]
    %v533 = vld [vmem:[#allocation4 + $0xe08] sm:$0xff]
    %v534 = vld [vmem:[#allocation4 + $0xe10] sm:$0xff]
    %v535 = vld [vmem:[#allocation4 + $0xe18] sm:$0xff]
    %v536 = vld [vmem:[#allocation4 + $0xe20] sm:$0xff]
    %v537 = vld [vmem:[#allocation4 + $0xe28] sm:$0xff]
    %v538 = vld [vmem:[#allocation4 + $0xe30] sm:$0xff]
    %v539 = vld [vmem:[#allocation4 + $0xe38] sm:$0xff]
    %v540 = vld [vmem:[#allocation4 + $0xe40] sm:$0xff]
    %v541 = vld [vmem:[#allocation4 + $0xe48] sm:$0xff]
    %v542 = vld [vmem:[#allocation4 + $0xe50] sm:$0xff]
    %v543 = vld [vmem:[#allocation4 + $0xe58] sm:$0xff]
    %v544 = vld [vmem:[#allocation4 + $0xe60] sm:$0xff]
    %v545 = vld [vmem:[#allocation4 + $0xe68] sm:$0xff]
    %v546 = vld [vmem:[#allocation4 + $0xe70] sm:$0xff]
    %v547 = vld [vmem:[#allocation4 + $0xe78] sm:$0xff]
    %v548 = vld [vmem:[#allocation4 + $0xe80] sm:$0xff]
    %v549 = vld [vmem:[#allocation4 + $0xe88] sm:$0xff]
    %v550 = vld [vmem:[#allocation4 + $0xe90] sm:$0xff]
    %v551 = vld [vmem:[#allocation4 + $0xe98] sm:$0xff]
    %v552 = vld [vmem:[#allocation4 + $0xea0] sm:$0xff]
    %v553 = vld [vmem:[#allocation4 + $0xea8] sm:$0xff]
    %v554 = vld [vmem:[#allocation4 + $0xeb0] sm:$0xff]
    %v555 = vld [vmem:[#allocation4 + $0xeb8] sm:$0xff]
    %v556 = vld [vmem:[#allocation4 + $0xec0] sm:$0xff]
    %v557 = vld [vmem:[#allocation4 + $0xec8] sm:$0xff]
    %v558 = vld [vmem:[#allocation4 + $0xed0] sm:$0xff]
    %v559 = vld [vmem:[#allocation4 + $0xed8] sm:$0xff]
    %v560 = vld [vmem:[#allocation4 + $0xee0] sm:$0xff]
    %v561 = vld [vmem:[#allocation4 + $0xee8] sm:$0xff]
    %v562 = vld [vmem:[#allocation4 + $0xef0] sm:$0xff]
    %v563 = vld [vmem:[#allocation4 + $0xef8] sm:$0xff]
    %v564 = vld [vmem:[#allocation4 + $0xf00] sm:$0xff]
    %v565 = vld [vmem:[#allocation4 + $0xf08] sm:$0xff]
    %v566 = vld [vmem:[#allocation4 + $0xf10] sm:$0xff]
    %v567 = vld [vmem:[#allocation4 + $0xf18] sm:$0xff]
    %v568 = vld [vmem:[#allocation4 + $0xf20] sm:$0xff]
    %v569 = vld [vmem:[#allocation4 + $0xf28] sm:$0xff]
    %v570 = vld [vmem:[#allocation4 + $0xf30] sm:$0xff]
    %v571 = vld [vmem:[#allocation4 + $0xf38] sm:$0xff]
    %v572 = vld [vmem:[#allocation4 + $0xf40] sm:$0xff]
    %v573 = vld [vmem:[#allocation4 + $0xf48] sm:$0xff]
    %v574 = vld [vmem:[#allocation4 + $0xf50] sm:$0xff]
    %v575 = vld [vmem:[#allocation4 + $0xf58] sm:$0xff]
    %v576 = vld [vmem:[#allocation4 + $0xf60] sm:$0xff]
    %v577 = vld [vmem:[#allocation4 + $0xf68] sm:$0xff]
    %v578 = vld [vmem:[#allocation4 + $0xf70] sm:$0xff]
    %v579 = vld [vmem:[#allocation4 + $0xf78] sm:$0xff]
    %v580 = vld [vmem:[#allocation4 + $0xf80] sm:$0xff]
    %v581 = vld [vmem:[#allocation4 + $0xf88] sm:$0xff]
    %v582 = vld [vmem:[#allocation4 + $0xf90] sm:$0xff]
    %v583 = vld [vmem:[#allocation4 + $0xf98] sm:$0xff]
    %v584 = vld [vmem:[#allocation4 + $0xfa0] sm:$0xff]
    %v585 = vld [vmem:[#allocation4 + $0xfa8] sm:$0xff]
    %v586 = vld [vmem:[#allocation4 + $0xfb0] sm:$0xff]
    %v587 = vld [vmem:[#allocation4 + $0xfb8] sm:$0xff]
    %v588 = vld [vmem:[#allocation4 + $0xfc0] sm:$0xff]
    %v589 = vld [vmem:[#allocation4 + $0xfc8] sm:$0xff]
    %v590 = vld [vmem:[#allocation4 + $0xfd0] sm:$0xff]
    %v591 = vld [vmem:[#allocation4 + $0xfd8] sm:$0xff]
    %v592 = vld [vmem:[#allocation4 + $0xfe0] sm:$0xff]
    %v593 = vld [vmem:[#allocation4 + $0xfe8] sm:$0xff]
    %v594 = vld [vmem:[#allocation4 + $0xff0] sm:$0xff]
    %v595 = vld [vmem:[#allocation4 + $0xff8] sm:$0xff]
    %v596 = vld [vmem:[#allocation4 + $0x1000] sm:$0xff]
    %v597 = vld [vmem:[#allocation4 + $0x1008] sm:$0xff]
    %v598 = vld [vmem:[#allocation4 + $0x1010] sm:$0xff]
    %v599 = vld [vmem:[#allocation4 + $0x1018] sm:$0xff]
    %v600 = vld [vmem:[#allocation4 + $0x1020] sm:$0xff]
    %v601 = vld [vmem:[#allocation4 + $0x1028] sm:$0xff]
    %v602 = vld [vmem:[#allocation4 + $0x1030] sm:$0xff]
    %v603 = vld [vmem:[#allocation4 + $0x1038] sm:$0xff]
    %v604 = vld [vmem:[#allocation4 + $0x1040] sm:$0xff]
    %v605 = vld [vmem:[#allocation4 + $0x1048] sm:$0xff]
    %v606 = vld [vmem:[#allocation4 + $0x1050] sm:$0xff]
    %v607 = vld [vmem:[#allocation4 + $0x1058] sm:$0xff]
    %v608 = vld [vmem:[#allocation4 + $0x1060] sm:$0xff]
    %v609 = vld [vmem:[#allocation4 + $0x1068] sm:$0xff]
    %v610 = vld [vmem:[#allocation4 + $0x1070] sm:$0xff]
    %v611 = vld [vmem:[#allocation4 + $0x1078] sm:$0xff]
    %v612 = vld [vmem:[#allocation4 + $0x1080] sm:$0xff]
    %v613 = vld [vmem:[#allocation4 + $0x1088] sm:$0xff]
    %v614 = vld [vmem:[#allocation4 + $0x1090] sm:$0xff]
    %v615 = vld [vmem:[#allocation4 + $0x1098] sm:$0xff]
    %v616 = vld [vmem:[#allocation4 + $0x10a0] sm:$0xff]
    %v617 = vld [vmem:[#allocation4 + $0x10a8] sm:$0xff]
    %v618 = vld [vmem:[#allocation4 + $0x10b0] sm:$0xff]
    %v619 = vld [vmem:[#allocation4 + $0x10b8] sm:$0xff]
    %v620 = vld [vmem:[#allocation4 + $0x10c0] sm:$0xff]
    %v621 = vld [vmem:[#allocation4 + $0x10c8] sm:$0xff]
    %v622 = vld [vmem:[#allocation4 + $0x10d0] sm:$0xff]
    %v623 = vld [vmem:[#allocation4 + $0x10d8] sm:$0xff]
    %v624 = vld [vmem:[#allocation4 + $0x10e0] sm:$0xff]
    %v625 = vld [vmem:[#allocation4 + $0x10e8] sm:$0xff]
    %v626 = vld [vmem:[#allocation4 + $0x10f0] sm:$0xff]
    %v627 = vld [vmem:[#allocation4 + $0x10f8] sm:$0xff]
    %v628 = vld [vmem:[#allocation4 + $0x1100] sm:$0xff]
    %v629 = vld [vmem:[#allocation4 + $0x1108] sm:$0xff]
    %v630 = vld [vmem:[#allocation4 + $0x1110] sm:$0xff]
    %v631 = vld [vmem:[#allocation4 + $0x1118] sm:$0xff]
    %v632 = vld [vmem:[#allocation4 + $0x1120] sm:$0xff]
    %v633 = vld [vmem:[#allocation4 + $0x1128] sm:$0xff]
    %v634 = vld [vmem:[#allocation4 + $0x1130] sm:$0xff]
    %v635 = vld [vmem:[#allocation4 + $0x1138] sm:$0xff]
    %v636 = vld [vmem:[#allocation4 + $0x1140] sm:$0xff]
    %v637 = vld [vmem:[#allocation4 + $0x1148] sm:$0xff]
    %v638 = vld [vmem:[#allocation4 + $0x1150] sm:$0xff]
    %v639 = vld [vmem:[#allocation4 + $0x1158] sm:$0xff]
    %v640 = vld [vmem:[#allocation4 + $0x1160] sm:$0xff]
    %v641 = vld [vmem:[#allocation4 + $0x1168] sm:$0xff]
    %v642 = vld [vmem:[#allocation4 + $0x1170] sm:$0xff]
    %v643 = vld [vmem:[#allocation4 + $0x1178] sm:$0xff]
    %v644 = vld [vmem:[#allocation4 + $0x1180] sm:$0xff]
    %v645 = vld [vmem:[#allocation4 + $0x1188] sm:$0xff]
    %v646 = vld [vmem:[#allocation4 + $0x1190] sm:$0xff]
    %v647 = vld [vmem:[#allocation4 + $0x1198] sm:$0xff]
    %v648 = vld [vmem:[#allocation4 + $0x11a0] sm:$0xff]
    %v649 = vld [vmem:[#allocation4 + $0x11a8] sm:$0xff]
    %v650 = vld [vmem:[#allocation4 + $0x11b0] sm:$0xff]
    %v651 = vld [vmem:[#allocation4 + $0x11b8] sm:$0xff]
    %v652 = vld [vmem:[#allocation4 + $0x11c0] sm:$0xff]
    %v653 = vld [vmem:[#allocation4 + $0x11c8] sm:$0xff]
    %v654 = vld [vmem:[#allocation4 + $0x11d0] sm:$0xff]
    %v655 = vld [vmem:[#allocation4 + $0x11d8] sm:$0xff]
    %v656 = vld [vmem:[#allocation4 + $0x11e0] sm:$0xff]
    %v657 = vld [vmem:[#allocation4 + $0x11e8] sm:$0xff]
    %v658 = vld [vmem:[#allocation4 + $0x11f0] sm:$0xff]
    %v659 = vld [vmem:[#allocation4 + $0x11f8] sm:$0xff]
    %v660 = vld [vmem:[#allocation6] sm:$0x3f]
    %v662 = vlaneseq
    %v663 = vshrl.u32 %v662, 7
    %v664 = vsub.s32 0, %v663
    %v665 = vrot.slane %v660, %v664
    %v666 = vlaneseq
    %v667 = vshrl.u32 %v666, 7
    %v668 = vsub.s32 1, %v667
    %v669 = vrot.slane %v660, %v668
    %v670 = vlaneseq
    %v671 = vshrl.u32 %v670, 7
    %v672 = vsub.s32 2, %v671
    %v673 = vrot.slane %v660, %v672
    %v674 = vlaneseq
    %v675 = vshrl.u32 %v674, 7
    %v676 = vsub.s32 3, %v675
    %v677 = vrot.slane %v660, %v676
    %v678 = vlaneseq
    %v679 = vshrl.u32 %v678, 7
    %v680 = vsub.s32 4, %v679
    %v681 = vrot.slane %v660, %v680
    %v682 = vlaneseq
    %v683 = vshrl.u32 %v682, 7
    %v684 = vsub.s32 5, %v683
    %v685 = vrot.slane %v660, %v684
    %692 = vmatprep.subr.mxu0 %v85
    %693 = vmatpush1.msra.mxu0 %v84
    %694 = vmatprep.subr.mxu0 %v91
    %695 = vmatpush1.msra.mxu0 %v90
    %696 = vmatprep.subr.mxu0 %v97
    %697 = vmatpush1.msra.mxu0 %v96
    %698 = vmatprep.subr.mxu0 %v103
    %699 = vmatpush1.msra.mxu0 %v102
    %700 = vmatprep.subr.mxu0 %v109
    %701 = vmatpush1.msra.mxu0 %v108
    %702 = vmatprep.subr.mxu0 %v115
    %703 = vmatpush1.msra.mxu0 %v114
    %704 = vmatprep.subr.mxu0 %v121
    %705 = vmatpush1.msra.mxu0 %v120
    %706 = vmatprep.subr.mxu0 %v127
    %707 = vmatpush1.msra.mxu0 %v126
    %708 = vmatprep.subr.mxu0 %v133
    %709 = vmatpush1.msra.mxu0 %v132
    %710 = vmatprep.subr.mxu0 %v139
    %711 = vmatpush1.msra.mxu0 %v138
    %712 = vmatprep.subr.mxu0 %v145
    %713 = vmatpush1.msra.mxu0 %v144
    %714 = vmatprep.subr.mxu0 %v151
    %715 = vmatpush1.msra.mxu0 %v150
    %716 = vmatprep.subr.mxu0 %v157
    %717 = vmatpush1.msra.mxu0 %v156
    %718 = vmatprep.subr.mxu0 %v163
    %719 = vmatpush1.msra.mxu0 %v162
    %720 = vmatprep.subr.mxu0 %v169
    %721 = vmatpush1.msra.mxu0 %v168
    %722 = vmatprep.subr.mxu0 %v175
    %723 = vmatpush1.msra.mxu0 %v174
    %724 = vmatprep.subr.mxu0 %v181
    %725 = vmatpush1.msra.mxu0 %v180
    %726 = vmatprep.subr.mxu0 %v187
    %727 = vmatpush1.msra.mxu0 %v186
    %728 = vmatprep.subr.mxu0 %v193
    %729 = vmatpush1.msra.mxu0 %v192
    %730 = vmatprep.subr.mxu0 %v199
    %731 = vmatpush1.msra.mxu0 %v198
    %732 = vmatprep.subr.mxu0 %v205
    %733 = vmatpush1.msra.mxu0 %v204
    %734 = vmatprep.subr.mxu0 %v211
    %735 = vmatpush1.msra.mxu0 %v210
    %736 = vmatprep.subr.mxu0 %v217
    %737 = vmatpush1.msra.mxu0 %v216
    %738 = vmatprep.subr.mxu0 %v223
    %739 = vmatpush1.msra.mxu0 %v222
    %740 = vmatprep.subr.mxu0 %v229
    %741 = vmatpush1.msra.mxu0 %v228
    %742 = vmatprep.subr.mxu0 %v235
    %743 = vmatpush1.msra.mxu0 %v234
    %744 = vmatprep.subr.mxu0 %v241
    %745 = vmatpush1.msra.mxu0 %v240
    %746 = vmatprep.subr.mxu0 %v247
    %747 = vmatpush1.msra.mxu0 %v246
    %748 = vmatprep.subr.mxu0 %v253
    %749 = vmatpush1.msra.mxu0 %v252
    %750 = vmatprep.subr.mxu0 %v259
    %751 = vmatpush1.msra.mxu0 %v258
    %752 = vmatprep.subr.mxu0 %v265
    %753 = vmatpush1.msra.mxu0 %v264
    %754 = vmatprep.subr.mxu0 %v271
    %755 = vmatpush1.msra.mxu0 %v270
    %756 = vmatprep.mubr.f32.mxu0 %v72
    %757 = vmatmul.mubr.f32.gmra.mrb[0].mxu0 %v71
    %v758 = vpop.f32.mrb[0].mxu0
    %v759 = vadd.f32 %v665, %v758
    %v760 = vpop.f32.mrb[0].mxu0
    %v761 = vadd.f32 %v669, %v760
    %762 = vmatprep.mubr.f32.mxu0 %v79
    %763 = vmatmul.mubr.f32.gmra.mrb[0].mxu0 %v78
    %v764 = vpop.f32.mrb[0].mxu0
    %v765 = vadd.f32 %v665, %v764
    %v766 = vpop.f32.mrb[0].mxu0
    %v767 = vadd.f32 %v669, %v766
    %768 = vdwg.mxu0
    %769 = vmatprep.subr.mxu0 %v277
    %770 = vmatpush1.msra.mxu0 %v276
    %771 = vmatprep.subr.mxu0 %v283
    %772 = vmatpush1.msra.mxu0 %v282
    %773 = vmatprep.subr.mxu0 %v289
    %774 = vmatpush1.msra.mxu0 %v288
    %775 = vmatprep.subr.mxu0 %v295
    %776 = vmatpush1.msra.mxu0 %v294
    %777 = vmatprep.subr.mxu0 %v301
    %778 = vmatpush1.msra.mxu0 %v300
    %779 = vmatprep.subr.mxu0 %v307
    %780 = vmatpush1.msra.mxu0 %v306
    %781 = vmatprep.subr.mxu0 %v313
    %782 = vmatpush1.msra.mxu0 %v312
    %783 = vmatprep.subr.mxu0 %v319
    %784 = vmatpush1.msra.mxu0 %v318
    %785 = vmatprep.subr.mxu0 %v325
    %786 = vmatpush1.msra.mxu0 %v324
    %787 = vmatprep.subr.mxu0 %v331
    %788 = vmatpush1.msra.mxu0 %v330
    %789 = vmatprep.subr.mxu0 %v337
    %790 = vmatpush1.msra.mxu0 %v336
    %791 = vmatprep.subr.mxu0 %v343
    %792 = vmatpush1.msra.mxu0 %v342
    %793 = vmatprep.subr.mxu0 %v349
    %794 = vmatpush1.msra.mxu0 %v348
    %795 = vmatprep.subr.mxu0 %v355
    %796 = vmatpush1.msra.mxu0 %v354
    %797 = vmatprep.subr.mxu0 %v361
    %798 = vmatpush1.msra.mxu0 %v360
    %799 = vmatprep.subr.mxu0 %v367
    %800 = vmatpush1.msra.mxu0 %v366
    %801 = vmatprep.subr.mxu0 %v373
    %802 = vmatpush1.msra.mxu0 %v372
    %803 = vmatprep.subr.mxu0 %v379
    %804 = vmatpush1.msra.mxu0 %v378
    %805 = vmatprep.subr.mxu0 %v385
    %806 = vmatpush1.msra.mxu0 %v384
    %807 = vmatprep.subr.mxu0 %v391
    %808 = vmatpush1.msra.mxu0 %v390
    %809 = vmatprep.subr.mxu0 %v397
    %810 = vmatpush1.msra.mxu0 %v396
    %811 = vmatprep.subr.mxu0 %v403
    %812 = vmatpush1.msra.mxu0 %v402
    %813 = vmatprep.subr.mxu0 %v409
    %814 = vmatpush1.msra.mxu0 %v408
    %815 = vmatprep.subr.mxu0 %v415
    %816 = vmatpush1.msra.mxu0 %v414
    %817 = vmatprep.subr.mxu0 %v421
    %818 = vmatpush1.msra.mxu0 %v420
    %819 = vmatprep.subr.mxu0 %v427
    %820 = vmatpush1.msra.mxu0 %v426
    %821 = vmatprep.subr.mxu0 %v433
    %822 = vmatpush1.msra.mxu0 %v432
    %823 = vmatprep.subr.mxu0 %v439
    %824 = vmatpush1.msra.mxu0 %v438
    %825 = vmatprep.subr.mxu0 %v445
    %826 = vmatpush1.msra.mxu0 %v444
    %827 = vmatprep.subr.mxu0 %v451
    %828 = vmatpush1.msra.mxu0 %v450
    %829 = vmatprep.subr.mxu0 %v457
    %830 = vmatpush1.msra.mxu0 %v456
    %831 = vmatprep.subr.mxu0 %v463
    %832 = vmatpush1.msra.mxu0 %v462
    %833 = vmatprep.mubr.f32.mxu0 %v74
    %834 = vmatmul.mubr.f32.gmra.mrb[0].mxu0 %v73
    %v835 = vpop.f32.mrb[0].mxu0
    %v836 = vadd.f32 %v759, %v835
    %v837 = vpop.f32.mrb[0].mxu0
    %v838 = vadd.f32 %v761, %v837
    %839 = vmatprep.mubr.f32.mxu0 %v81
    %840 = vmatmul.mubr.f32.gmra.mrb[0].mxu0 %v80
    %v841 = vpop.f32.mrb[0].mxu0
    %v842 = vadd.f32 %v765, %v841
    %v843 = vpop.f32.mrb[0].mxu0
    %v844 = vadd.f32 %v767, %v843
    %845 = vdwg.mxu0
    %846 = vmatprep.subr.mxu0 %v469
    %847 = vmatpush1.msra.mxu0 %v468
    %848 = vmatprep.subr.mxu0 %v475
    %849 = vmatpush1.msra.mxu0 %v474
    %850 = vmatprep.subr.mxu0 %v481
    %851 = vmatpush1.msra.mxu0 %v480
    %852 = vmatprep.subr.mxu0 %v487
    %853 = vmatpush1.msra.mxu0 %v486
    %854 = vmatprep.subr.mxu0 %v493
    %855 = vmatpush1.msra.mxu0 %v492
    %856 = vmatprep.subr.mxu0 %v499
    %857 = vmatpush1.msra.mxu0 %v498
    %858 = vmatprep.subr.mxu0 %v505
    %859 = vmatpush1.msra.mxu0 %v504
    %860 = vmatprep.subr.mxu0 %v511
    %861 = vmatpush1.msra.mxu0 %v510
    %862 = vmatprep.subr.mxu0 %v517
    %863 = vmatpush1.msra.mxu0 %v516
    %864 = vmatprep.subr.mxu0 %v523
    %865 = vmatpush1.msra.mxu0 %v522
    %866 = vmatprep.subr.mxu0 %v529
    %867 = vmatpush1.msra.mxu0 %v528
    %868 = vmatprep.subr.mxu0 %v535
    %869 = vmatpush1.msra.mxu0 %v534
    %870 = vmatprep.subr.mxu0 %v541
    %871 = vmatpush1.msra.mxu0 %v540
    %872 = vmatprep.subr.mxu0 %v547
    %873 = vmatpush1.msra.mxu0 %v546
    %874 = vmatprep.subr.mxu0 %v553
    %875 = vmatpush1.msra.mxu0 %v552
    %876 = vmatprep.subr.mxu0 %v559
    %877 = vmatpush1.msra.mxu0 %v558
    %878 = vmatprep.subr.mxu0 %v565
    %879 = vmatpush1.msra.mxu0 %v564
    %880 = vmatprep.subr.mxu0 %v571
    %881 = vmatpush1.msra.mxu0 %v570
    %882 = vmatprep.subr.mxu0 %v577
    %883 = vmatpush1.msra.mxu0 %v576
    %884 = vmatprep.subr.mxu0 %v583
    %885 = vmatpush1.msra.mxu0 %v582
    %886 = vmatprep.subr.mxu0 %v589
    %887 = vmatpush1.msra.mxu0 %v588
    %888 = vmatprep.subr.mxu0 %v595
    %889 = vmatpush1.msra.mxu0 %v594
    %890 = vmatprep.subr.mxu0 %v601
    %891 = vmatpush1.msra.mxu0 %v600
    %892 = vmatprep.subr.mxu0 %v607
    %893 = vmatpush1.msra.mxu0 %v606
    %894 = vmatprep.subr.mxu0 %v613
    %895 = vmatpush1.msra.mxu0 %v612
    %896 = vmatprep.subr.mxu0 %v619
    %897 = vmatpush1.msra.mxu0 %v618
    %898 = vmatprep.subr.mxu0 %v625
    %899 = vmatpush1.msra.mxu0 %v624
    %900 = vmatprep.subr.mxu0 %v631
    %901 = vmatpush1.msra.mxu0 %v630
    %902 = vmatprep.subr.mxu0 %v637
    %903 = vmatpush1.msra.mxu0 %v636
    %904 = vmatprep.subr.mxu0 %v643
    %905 = vmatpush1.msra.mxu0 %v642
    %906 = vmatprep.subr.mxu0 %v649
    %907 = vmatpush1.msra.mxu0 %v648
    %908 = vmatprep.subr.mxu0 %v655
    %909 = vmatpush1.msra.mxu0 %v654
    %910 = vmatprep.mubr.f32.mxu0 %v76
    %911 = vmatmul.mubr.f32.gmra.mrb[0].mxu0 %v75
    %v912 = vpop.f32.mrb[0].mxu0
    %v913 = vadd.f32 %v836, %v912
    %v914 = vpop.f32.mrb[0].mxu0
    %v915 = vadd.f32 %v838, %v914
    %916 = vmatprep.mubr.f32.mxu0 %v83
    %917 = vmatmul.mubr.f32.gmra.mrb[0].mxu0 %v82
    %v918 = vpop.f32.mrb[0].mxu0
    %v919 = vadd.f32 %v842, %v918
    %v920 = vpop.f32.mrb[0].mxu0
    %v921 = vadd.f32 %v844, %v920
    %922 = vdwg.mxu0
    %923 = vmatprep.subr.mxu0 %v87
    %924 = vmatpush1.msra.mxu0 %v86
    %925 = vmatprep.subr.mxu0 %v93
    %926 = vmatpush1.msra.mxu0 %v92
    %927 = vmatprep.subr.mxu0 %v99
    %928 = vmatpush1.msra.mxu0 %v98
    %929 = vmatprep.subr.mxu0 %v105
    %930 = vmatpush1.msra.mxu0 %v104
    %931 = vmatprep.subr.mxu0 %v111
    %932 = vmatpush1.msra.mxu0 %v110
    %933 = vmatprep.subr.mxu0 %v117
    %934 = vmatpush1.msra.mxu0 %v116
    %935 = vmatprep.subr.mxu0 %v123
    %936 = vmatpush1.msra.mxu0 %v122
    %937 = vmatprep.subr.mxu0 %v129
    %938 = vmatpush1.msra.mxu0 %v128
    %939 = vmatprep.subr.mxu0 %v135
    %940 = vmatpush1.msra.mxu0 %v134
    %941 = vmatprep.subr.mxu0 %v141
    %942 = vmatpush1.msra.mxu0 %v140
    %943 = vmatprep.subr.mxu0 %v147
    %944 = vmatpush1.msra.mxu0 %v146
    %945 = vmatprep.subr.mxu0 %v153
    %946 = vmatpush1.msra.mxu0 %v152
    %947 = vmatprep.subr.mxu0 %v159
    %948 = vmatpush1.msra.mxu0 %v158
    %949 = vmatprep.subr.mxu0 %v165
    %950 = vmatpush1.msra.mxu0 %v164
    %951 = vmatprep.subr.mxu0 %v171
    %952 = vmatpush1.msra.mxu0 %v170
    %953 = vmatprep.subr.mxu0 %v177
    %954 = vmatpush1.msra.mxu0 %v176
    %955 = vmatprep.subr.mxu0 %v183
    %956 = vmatpush1.msra.mxu0 %v182
    %957 = vmatprep.subr.mxu0 %v189
    %958 = vmatpush1.msra.mxu0 %v188
    %959 = vmatprep.subr.mxu0 %v195
    %960 = vmatpush1.msra.mxu0 %v194
    %961 = vmatprep.subr.mxu0 %v201
    %962 = vmatpush1.msra.mxu0 %v200
    %963 = vmatprep.subr.mxu0 %v207
    %964 = vmatpush1.msra.mxu0 %v206
    %965 = vmatprep.subr.mxu0 %v213
    %966 = vmatpush1.msra.mxu0 %v212
    %967 = vmatprep.subr.mxu0 %v219
    %968 = vmatpush1.msra.mxu0 %v218
    %969 = vmatprep.subr.mxu0 %v225
    %970 = vmatpush1.msra.mxu0 %v224
    %971 = vmatprep.subr.mxu0 %v231
    %972 = vmatpush1.msra.mxu0 %v230
    %973 = vmatprep.subr.mxu0 %v237
    %974 = vmatpush1.msra.mxu0 %v236
    %975 = vmatprep.subr.mxu0 %v243
    %976 = vmatpush1.msra.mxu0 %v242
    %977 = vmatprep.subr.mxu0 %v249
    %978 = vmatpush1.msra.mxu0 %v248
    %979 = vmatprep.subr.mxu0 %v255
    %980 = vmatpush1.msra.mxu0 %v254
    %981 = vmatprep.subr.mxu0 %v261
    %982 = vmatpush1.msra.mxu0 %v260
    %983 = vmatprep.subr.mxu0 %v267
    %984 = vmatpush1.msra.mxu0 %v266
    %985 = vmatprep.subr.mxu0 %v273
    %986 = vmatpush1.msra.mxu0 %v272
    %987 = vmatprep.mubr.f32.mxu0 %v72
    %988 = vmatmul.mubr.f32.gmra.mrb[0].mxu0 %v71
    %v989 = vpop.f32.mrb[0].mxu0
    %v990 = vadd.f32 %v673, %v989
    %v991 = vpop.f32.mrb[0].mxu0
    %v992 = vadd.f32 %v677, %v991
    %993 = vmatprep.mubr.f32.mxu0 %v79
    %994 = vmatmul.mubr.f32.gmra.mrb[0].mxu0 %v78
    %v995 = vpop.f32.mrb[0].mxu0
    %v996 = vadd.f32 %v673, %v995
    %v997 = vpop.f32.mrb[0].mxu0
    %v998 = vadd.f32 %v677, %v997
    %999 = vdwg.mxu0
    %1000 = vmatprep.subr.mxu0 %v279
    %1001 = vmatpush1.msra.mxu0 %v278
    %1002 = vmatprep.subr.mxu0 %v285
    %1003 = vmatpush1.msra.mxu0 %v284
    %1004 = vmatprep.subr.mxu0 %v291
    %1005 = vmatpush1.msra.mxu0 %v290
    %1006 = vmatprep.subr.mxu0 %v297
    %1007 = vmatpush1.msra.mxu0 %v296
    %1008 = vmatprep.subr.mxu0 %v303
    %1009 = vmatpush1.msra.mxu0 %v302
    %1010 = vmatprep.subr.mxu0 %v309
    %1011 = vmatpush1.msra.mxu0 %v308
    %1012 = vmatprep.subr.mxu0 %v315
    %1013 = vmatpush1.msra.mxu0 %v314
    %1014 = vmatprep.subr.mxu0 %v321
    %1015 = vmatpush1.msra.mxu0 %v320
    %1016 = vmatprep.subr.mxu0 %v327
    %1017 = vmatpush1.msra.mxu0 %v326
    %1018 = vmatprep.subr.mxu0 %v333
    %1019 = vmatpush1.msra.mxu0 %v332
    %1020 = vmatprep.subr.mxu0 %v339
    %1021 = vmatpush1.msra.mxu0 %v338
    %1022 = vmatprep.subr.mxu0 %v345
    %1023 = vmatpush1.msra.mxu0 %v344
    %1024 = vmatprep.subr.mxu0 %v351
    %1025 = vmatpush1.msra.mxu0 %v350
    %1026 = vmatprep.subr.mxu0 %v357
    %1027 = vmatpush1.msra.mxu0 %v356
    %1028 = vmatprep.subr.mxu0 %v363
    %1029 = vmatpush1.msra.mxu0 %v362
    %1030 = vmatprep.subr.mxu0 %v369
    %1031 = vmatpush1.msra.mxu0 %v368
    %1032 = vmatprep.subr.mxu0 %v375
    %1033 = vmatpush1.msra.mxu0 %v374
    %1034 = vmatprep.subr.mxu0 %v381
    %1035 = vmatpush1.msra.mxu0 %v380
    %1036 = vmatprep.subr.mxu0 %v387
    %1037 = vmatpush1.msra.mxu0 %v386
    %1038 = vmatprep.subr.mxu0 %v393
    %1039 = vmatpush1.msra.mxu0 %v392
    %1040 = vmatprep.subr.mxu0 %v399
    %1041 = vmatpush1.msra.mxu0 %v398
    %1042 = vmatprep.subr.mxu0 %v405
    %1043 = vmatpush1.msra.mxu0 %v404
    %1044 = vmatprep.subr.mxu0 %v411
    %1045 = vmatpush1.msra.mxu0 %v410
    %1046 = vmatprep.subr.mxu0 %v417
    %1047 = vmatpush1.msra.mxu0 %v416
    %1048 = vmatprep.subr.mxu0 %v423
    %1049 = vmatpush1.msra.mxu0 %v422
    %1050 = vmatprep.subr.mxu0 %v429
    %1051 = vmatpush1.msra.mxu0 %v428
    %1052 = vmatprep.subr.mxu0 %v435
    %1053 = vmatpush1.msra.mxu0 %v434
    %1054 = vmatprep.subr.mxu0 %v441
    %1055 = vmatpush1.msra.mxu0 %v440
    %1056 = vmatprep.subr.mxu0 %v447
    %1057 = vmatpush1.msra.mxu0 %v446
    %1058 = vmatprep.subr.mxu0 %v453
    %1059 = vmatpush1.msra.mxu0 %v452
    %1060 = vmatprep.subr.mxu0 %v459
    %1061 = vmatpush1.msra.mxu0 %v458
    %1062 = vmatprep.subr.mxu0 %v465
    %1063 = vmatpush1.msra.mxu0 %v464
    %1064 = vmatprep.mubr.f32.mxu0 %v74
    %1065 = vmatmul.mubr.f32.gmra.mrb[0].mxu0 %v73
    %v1066 = vpop.f32.mrb[0].mxu0
    %v1067 = vadd.f32 %v990, %v1066
    %v1068 = vpop.f32.mrb[0].mxu0
    %v1069 = vadd.f32 %v992, %v1068
    %1070 = vmatprep.mubr.f32.mxu0 %v81
    %1071 = vmatmul.mubr.f32.gmra.mrb[0].mxu0 %v80
    %v1072 = vpop.f32.mrb[0].mxu0
    %v1073 = vadd.f32 %v996, %v1072
    %v1074 = vpop.f32.mrb[0].mxu0
    %v1075 = vadd.f32 %v998, %v1074
    %1076 = vdwg.mxu0
    %1077 = vmatprep.subr.mxu0 %v471
    %1078 = vmatpush1.msra.mxu0 %v470
    %1079 = vmatprep.subr.mxu0 %v477
    %1080 = vmatpush1.msra.mxu0 %v476
    %1081 = vmatprep.subr.mxu0 %v483
    %1082 = vmatpush1.msra.mxu0 %v482
    %1083 = vmatprep.subr.mxu0 %v489
    %1084 = vmatpush1.msra.mxu0 %v488
    %1085 = vmatprep.subr.mxu0 %v495
    %1086 = vmatpush1.msra.mxu0 %v494
    %1087 = vmatprep.subr.mxu0 %v501
    %1088 = vmatpush1.msra.mxu0 %v500
    %1089 = vmatprep.subr.mxu0 %v507
    %1090 = vmatpush1.msra.mxu0 %v506
    %1091 = vmatprep.subr.mxu0 %v513
    %1092 = vmatpush1.msra.mxu0 %v512
    %1093 = vmatprep.subr.mxu0 %v519
    %1094 = vmatpush1.msra.mxu0 %v518
    %1095 = vmatprep.subr.mxu0 %v525
    %1096 = vmatpush1.msra.mxu0 %v524
    %1097 = vmatprep.subr.mxu0 %v531
    %1098 = vmatpush1.msra.mxu0 %v530
    %1099 = vmatprep.subr.mxu0 %v537
    %1100 = vmatpush1.msra.mxu0 %v536
    %1101 = vmatprep.subr.mxu0 %v543
    %1102 = vmatpush1.msra.mxu0 %v542
    %1103 = vmatprep.subr.mxu0 %v549
    %1104 = vmatpush1.msra.mxu0 %v548
    %1105 = vmatprep.subr.mxu0 %v555
    %1106 = vmatpush1.msra.mxu0 %v554
    %1107 = vmatprep.subr.mxu0 %v561
    %1108 = vmatpush1.msra.mxu0 %v560
    %1109 = vmatprep.subr.mxu0 %v567
    %1110 = vmatpush1.msra.mxu0 %v566
    %1111 = vmatprep.subr.mxu0 %v573
    %1112 = vmatpush1.msra.mxu0 %v572
    %1113 = vmatprep.subr.mxu0 %v579
    %1114 = vmatpush1.msra.mxu0 %v578
    %1115 = vmatprep.subr.mxu0 %v585
    %1116 = vmatpush1.msra.mxu0 %v584
    %1117 = vmatprep.subr.mxu0 %v591
    %1118 = vmatpush1.msra.mxu0 %v590
    %1119 = vmatprep.subr.mxu0 %v597
    %1120 = vmatpush1.msra.mxu0 %v596
    %1121 = vmatprep.subr.mxu0 %v603
    %1122 = vmatpush1.msra.mxu0 %v602
    %1123 = vmatprep.subr.mxu0 %v609
    %1124 = vmatpush1.msra.mxu0 %v608
    %1125 = vmatprep.subr.mxu0 %v615
    %1126 = vmatpush1.msra.mxu0 %v614
    %1127 = vmatprep.subr.mxu0 %v621
    %1128 = vmatpush1.msra.mxu0 %v620
    %1129 = vmatprep.subr.mxu0 %v627
    %1130 = vmatpush1.msra.mxu0 %v626
    %1131 = vmatprep.subr.mxu0 %v633
    %1132 = vmatpush1.msra.mxu0 %v632
    %1133 = vmatprep.subr.mxu0 %v639
    %1134 = vmatpush1.msra.mxu0 %v638
    %1135 = vmatprep.subr.mxu0 %v645
    %1136 = vmatpush1.msra.mxu0 %v644
    %1137 = vmatprep.subr.mxu0 %v651
    %1138 = vmatpush1.msra.mxu0 %v650
    %1139 = vmatprep.subr.mxu0 %v657
    %1140 = vmatpush1.msra.mxu0 %v656
    %1141 = vmatprep.mubr.f32.mxu0 %v76
    %1142 = vmatmul.mubr.f32.gmra.mrb[0].mxu0 %v75
    %v1143 = vpop.f32.mrb[0].mxu0
    %v1144 = vadd.f32 %v1067, %v1143
    %v1145 = vpop.f32.mrb[0].mxu0
    %v1146 = vadd.f32 %v1069, %v1145
    %1147 = vmatprep.mubr.f32.mxu0 %v83
    %1148 = vmatmul.mubr.f32.gmra.mrb[0].mxu0 %v82
    %v1149 = vpop.f32.mrb[0].mxu0
    %v1150 = vadd.f32 %v1073, %v1149
    %v1151 = vpop.f32.mrb[0].mxu0
    %v1152 = vadd.f32 %v1075, %v1151
    %1153 = vdwg.mxu0
    %1154 = vmatprep.subr.mxu0 %v89
    %1155 = vmatpush1.msra.mxu0 %v88
    %1156 = vmatprep.subr.mxu0 %v95
    %1157 = vmatpush1.msra.mxu0 %v94
    %1158 = vmatprep.subr.mxu0 %v101
    %1159 = vmatpush1.msra.mxu0 %v100
    %1160 = vmatprep.subr.mxu0 %v107
    %1161 = vmatpush1.msra.mxu0 %v106
    %1162 = vmatprep.subr.mxu0 %v113
    %1163 = vmatpush1.msra.mxu0 %v112
    %1164 = vmatprep.subr.mxu0 %v119
    %1165 = vmatpush1.msra.mxu0 %v118
    %1166 = vmatprep.subr.mxu0 %v125
    %1167 = vmatpush1.msra.mxu0 %v124
    %1168 = vmatprep.subr.mxu0 %v131
    %1169 = vmatpush1.msra.mxu0 %v130
    %1170 = vmatprep.subr.mxu0 %v137
    %1171 = vmatpush1.msra.mxu0 %v136
    %1172 = vmatprep.subr.mxu0 %v143
    %1173 = vmatpush1.msra.mxu0 %v142
    %1174 = vmatprep.subr.mxu0 %v149
    %1175 = vmatpush1.msra.mxu0 %v148
    %1176 = vmatprep.subr.mxu0 %v155
    %1177 = vmatpush1.msra.mxu0 %v154
    %1178 = vmatprep.subr.mxu0 %v161
    %1179 = vmatpush1.msra.mxu0 %v160
    %1180 = vmatprep.subr.mxu0 %v167
    %1181 = vmatpush1.msra.mxu0 %v166
    %1182 = vmatprep.subr.mxu0 %v173
    %1183 = vmatpush1.msra.mxu0 %v172
    %1184 = vmatprep.subr.mxu0 %v179
    %1185 = vmatpush1.msra.mxu0 %v178
    %1186 = vmatprep.subr.mxu0 %v185
    %1187 = vmatpush1.msra.mxu0 %v184
    %1188 = vmatprep.subr.mxu0 %v191
    %1189 = vmatpush1.msra.mxu0 %v190
    %1190 = vmatprep.subr.mxu0 %v197
    %1191 = vmatpush1.msra.mxu0 %v196
    %1192 = vmatprep.subr.mxu0 %v203
    %1193 = vmatpush1.msra.mxu0 %v202
    %1194 = vmatprep.subr.mxu0 %v209
    %1195 = vmatpush1.msra.mxu0 %v208
    %1196 = vmatprep.subr.mxu0 %v215
    %1197 = vmatpush1.msra.mxu0 %v214
    %1198 = vmatprep.subr.mxu0 %v221
    %1199 = vmatpush1.msra.mxu0 %v220
    %1200 = vmatprep.subr.mxu0 %v227
    %1201 = vmatpush1.msra.mxu0 %v226
    %1202 = vmatprep.subr.mxu0 %v233
    %1203 = vmatpush1.msra.mxu0 %v232
    %1204 = vmatprep.subr.mxu0 %v239
    %1205 = vmatpush1.msra.mxu0 %v238
    %1206 = vmatprep.subr.mxu0 %v245
    %1207 = vmatpush1.msra.mxu0 %v244
    %1208 = vmatprep.subr.mxu0 %v251
    %1209 = vmatpush1.msra.mxu0 %v250
    %1210 = vmatprep.subr.mxu0 %v257
    %1211 = vmatpush1.msra.mxu0 %v256
    %1212 = vmatprep.subr.mxu0 %v263
    %1213 = vmatpush1.msra.mxu0 %v262
    %1214 = vmatprep.subr.mxu0 %v269
    %1215 = vmatpush1.msra.mxu0 %v268
    %1216 = vmatprep.subr.mxu0 %v275
    %1217 = vmatpush1.msra.mxu0 %v274
    %1218 = vmatprep.mubr.f32.mxu0 %v72
    %1219 = vmatmul.mubr.f32.gmra.mrb[0].mxu0 %v71
    %v1220 = vpop.f32.mrb[0].mxu0
    %v1221 = vadd.f32 %v681, %v1220
    %v1222 = vpop.f32.mrb[0].mxu0
    %v1223 = vadd.f32 %v685, %v1222
    %1224 = vmatprep.mubr.f32.mxu0 %v79
    %1225 = vmatmul.mubr.f32.gmra.mrb[0].mxu0 %v78
    %v1226 = vpop.f32.mrb[0].mxu0
    %v1227 = vadd.f32 %v681, %v1226
    %v1228 = vpop.f32.mrb[0].mxu0
    %v1229 = vadd.f32 %v685, %v1228
    %1230 = vdwg.mxu0
    %1231 = vmatprep.subr.mxu0 %v281
    %1232 = vmatpush1.msra.mxu0 %v280
    %1233 = vmatprep.subr.mxu0 %v287
    %1234 = vmatpush1.msra.mxu0 %v286
    %1235 = vmatprep.subr.mxu0 %v293
    %1236 = vmatpush1.msra.mxu0 %v292
    %1237 = vmatprep.subr.mxu0 %v299
    %1238 = vmatpush1.msra.mxu0 %v298
    %1239 = vmatprep.subr.mxu0 %v305
    %1240 = vmatpush1.msra.mxu0 %v304
    %1241 = vmatprep.subr.mxu0 %v311
    %1242 = vmatpush1.msra.mxu0 %v310
    %1243 = vmatprep.subr.mxu0 %v317
    %1244 = vmatpush1.msra.mxu0 %v316
    %1245 = vmatprep.subr.mxu0 %v323
    %1246 = vmatpush1.msra.mxu0 %v322
    %1247 = vmatprep.subr.mxu0 %v329
    %1248 = vmatpush1.msra.mxu0 %v328
    %1249 = vmatprep.subr.mxu0 %v335
    %1250 = vmatpush1.msra.mxu0 %v334
    %1251 = vmatprep.subr.mxu0 %v341
    %1252 = vmatpush1.msra.mxu0 %v340
    %1253 = vmatprep.subr.mxu0 %v347
    %1254 = vmatpush1.msra.mxu0 %v346
    %1255 = vmatprep.subr.mxu0 %v353
    %1256 = vmatpush1.msra.mxu0 %v352
    %1257 = vmatprep.subr.mxu0 %v359
    %1258 = vmatpush1.msra.mxu0 %v358
    %1259 = vmatprep.subr.mxu0 %v365
    %1260 = vmatpush1.msra.mxu0 %v364
    %1261 = vmatprep.subr.mxu0 %v371
    %1262 = vmatpush1.msra.mxu0 %v370
    %1263 = vmatprep.subr.mxu0 %v377
    %1264 = vmatpush1.msra.mxu0 %v376
    %1265 = vmatprep.subr.mxu0 %v383
    %1266 = vmatpush1.msra.mxu0 %v382
    %1267 = vmatprep.subr.mxu0 %v389
    %1268 = vmatpush1.msra.mxu0 %v388
    %1269 = vmatprep.subr.mxu0 %v395
    %1270 = vmatpush1.msra.mxu0 %v394
    %1271 = vmatprep.subr.mxu0 %v401
    %1272 = vmatpush1.msra.mxu0 %v400
    %1273 = vmatprep.subr.mxu0 %v407
    %1274 = vmatpush1.msra.mxu0 %v406
    %1275 = vmatprep.subr.mxu0 %v413
    %1276 = vmatpush1.msra.mxu0 %v412
    %1277 = vmatprep.subr.mxu0 %v419
    %1278 = vmatpush1.msra.mxu0 %v418
    %1279 = vmatprep.subr.mxu0 %v425
    %1280 = vmatpush1.msra.mxu0 %v424
    %1281 = vmatprep.subr.mxu0 %v431
    %1282 = vmatpush1.msra.mxu0 %v430
    %1283 = vmatprep.subr.mxu0 %v437
    %1284 = vmatpush1.msra.mxu0 %v436
    %1285 = vmatprep.subr.mxu0 %v443
    %1286 = vmatpush1.msra.mxu0 %v442
    %1287 = vmatprep.subr.mxu0 %v449
    %1288 = vmatpush1.msra.mxu0 %v448
    %1289 = vmatprep.subr.mxu0 %v455
    %1290 = vmatpush1.msra.mxu0 %v454
    %1291 = vmatprep.subr.mxu0 %v461
    %1292 = vmatpush1.msra.mxu0 %v460
    %1293 = vmatprep.subr.mxu0 %v467
    %1294 = vmatpush1.msra.mxu0 %v466
    %1295 = vmatprep.mubr.f32.mxu0 %v74
    %1296 = vmatmul.mubr.f32.gmra.mrb[0].mxu0 %v73
    %v1297 = vpop.f32.mrb[0].mxu0
    %v1298 = vadd.f32 %v1221, %v1297
    %v1299 = vpop.f32.mrb[0].mxu0
    %v1300 = vadd.f32 %v1223, %v1299
    %1301 = vmatprep.mubr.f32.mxu0 %v81
    %1302 = vmatmul.mubr.f32.gmra.mrb[0].mxu0 %v80
    %v1303 = vpop.f32.mrb[0].mxu0
    %v1304 = vadd.f32 %v1227, %v1303
    %v1305 = vpop.f32.mrb[0].mxu0
    %v1306 = vadd.f32 %v1229, %v1305
    %1307 = vdwg.mxu0
    %1308 = vmatprep.subr.mxu0 %v473
    %1309 = vmatpush1.msra.mxu0 %v472
    %1310 = vmatprep.subr.mxu0 %v479
    %1311 = vmatpush1.msra.mxu0 %v478
    %1312 = vmatprep.subr.mxu0 %v485
    %1313 = vmatpush1.msra.mxu0 %v484
    %1314 = vmatprep.subr.mxu0 %v491
    %1315 = vmatpush1.msra.mxu0 %v490
    %1316 = vmatprep.subr.mxu0 %v497
    %1317 = vmatpush1.msra.mxu0 %v496
    %1318 = vmatprep.subr.mxu0 %v503
    %1319 = vmatpush1.msra.mxu0 %v502
    %1320 = vmatprep.subr.mxu0 %v509
    %1321 = vmatpush1.msra.mxu0 %v508
    %1322 = vmatprep.subr.mxu0 %v515
    %1323 = vmatpush1.msra.mxu0 %v514
    %1324 = vmatprep.subr.mxu0 %v521
    %1325 = vmatpush1.msra.mxu0 %v520
    %1326 = vmatprep.subr.mxu0 %v527
    %1327 = vmatpush1.msra.mxu0 %v526
    %1328 = vmatprep.subr.mxu0 %v533
    %1329 = vmatpush1.msra.mxu0 %v532
    %1330 = vmatprep.subr.mxu0 %v539
    %1331 = vmatpush1.msra.mxu0 %v538
    %1332 = vmatprep.subr.mxu0 %v545
    %1333 = vmatpush1.msra.mxu0 %v544
    %1334 = vmatprep.subr.mxu0 %v551
    %1335 = vmatpush1.msra.mxu0 %v550
    %1336 = vmatprep.subr.mxu0 %v557
    %1337 = vmatpush1.msra.mxu0 %v556
    %1338 = vmatprep.subr.mxu0 %v563
    %1339 = vmatpush1.msra.mxu0 %v562
    %1340 = vmatprep.subr.mxu0 %v569
    %1341 = vmatpush1.msra.mxu0 %v568
    %1342 = vmatprep.subr.mxu0 %v575
    %1343 = vmatpush1.msra.mxu0 %v574
    %1344 = vmatprep.subr.mxu0 %v581
    %1345 = vmatpush1.msra.mxu0 %v580
    %1346 = vmatprep.subr.mxu0 %v587
    %1347 = vmatpush1.msra.mxu0 %v586
    %1348 = vmatprep.subr.mxu0 %v593
    %1349 = vmatpush1.msra.mxu0 %v592
    %1350 = vmatprep.subr.mxu0 %v599
    %1351 = vmatpush1.msra.mxu0 %v598
    %1352 = vmatprep.subr.mxu0 %v605
    %1353 = vmatpush1.msra.mxu0 %v604
    %1354 = vmatprep.subr.mxu0 %v611
    %1355 = vmatpush1.msra.mxu0 %v610
    %1356 = vmatprep.subr.mxu0 %v617
    %1357 = vmatpush1.msra.mxu0 %v616
    %1358 = vmatprep.subr.mxu0 %v623
    %1359 = vmatpush1.msra.mxu0 %v622
    %1360 = vmatprep.subr.mxu0 %v629
    %1361 = vmatpush1.msra.mxu0 %v628
    %1362 = vmatprep.subr.mxu0 %v635
    %1363 = vmatpush1.msra.mxu0 %v634
    %1364 = vmatprep.subr.mxu0 %v641
    %1365 = vmatpush1.msra.mxu0 %v640
    %1366 = vmatprep.subr.mxu0 %v647
    %1367 = vmatpush1.msra.mxu0 %v646
    %1368 = vmatprep.subr.mxu0 %v653
    %1369 = vmatpush1.msra.mxu0 %v652
    %1370 = vmatprep.subr.mxu0 %v659
    %1371 = vmatpush1.msra.mxu0 %v658
    %1372 = vmatprep.mubr.f32.mxu0 %v76
    %1373 = vmatmul.mubr.f32.gmra.mrb[0].mxu0 %v75
    %v1374 = vpop.f32.mrb[0].mxu0
    %v1375 = vadd.f32 %v1298, %v1374
    %v1376 = vpop.f32.mrb[0].mxu0
    %v1377 = vadd.f32 %v1300, %v1376
    %1378 = vmatprep.mubr.f32.mxu0 %v83
    %1379 = vmatmul.mubr.f32.gmra.mrb[0].mxu0 %v82
    %v1380 = vpop.f32.mrb[0].mxu0
    %v1381 = vadd.f32 %v1304, %v1380
    %v1382 = vpop.f32.mrb[0].mxu0
    %v1383 = vadd.f32 %v1306, %v1382
    %1384 = vdwg.mxu0
    %v1385 = vtanh.pop %v913
    %v1386 = vtanh.pop %v915
    %v1387 = vtanh.pop %v1144
    %v1388 = vtanh.pop %v1146
    %v1389 = vtanh.pop %v1375
    %v1390 = vtanh.pop %v1377
    %v1391 = vtanh.pop %v919
    %v1392 = vtanh.pop %v921
    %v1393 = vtanh.pop %v1150
    %v1394 = vtanh.pop %v1152
    %v1395 = vtanh.pop %v1381
    %v1396 = vtanh.pop %v1383
    %v1397 = vmul.f32 %v1385, %v1391
    %v1398 = vmul.f32 %v1386, %v1392
    %v1399 = vmul.f32 %v1387, %v1393
    %v1400 = vmul.f32 %v1388, %v1394
    %v1401 = vmul.f32 %v1389, %v1395
    %v1402 = vmul.f32 %v1390, %v1396
    %v1403 = vld [vmem:[%s3] sm:$0xff]
    %v1404 = vld [vmem:[%s3 + $0x8] sm:$0xff]
    %v1405 = vld [vmem:[%s3 + $0x10] sm:$0xff]
    %v1406 = vld [vmem:[%s3 + $0x18] sm:$0xff]
    %v1407 = vld [vmem:[%s3 + $0x20] sm:$0xff]
    %v1408 = vld [vmem:[%s3 + $0x28] sm:$0xff]
    %v1409 = vld [vmem:[%s3 + $0x30] sm:$0xff]
    %v1410 = vld [vmem:[%s3 + $0x38] sm:$0xff]
    %v1411 = vld [vmem:[%s3 + $0x40] sm:$0xff]
    %v1412 = vld [vmem:[%s3 + $0x48] sm:$0xff]
    %v1413 = vld [vmem:[%s3 + $0x50] sm:$0xff]
    %v1414 = vld [vmem:[%s3 + $0x58] sm:$0xff]
    %v1415 = vld [vmem:[%s3 + $0x60] sm:$0xff]
    %v1416 = vld [vmem:[%s3 + $0x68] sm:$0xff]
    %v1417 = vld [vmem:[%s3 + $0x70] sm:$0xff]
    %v1418 = vld [vmem:[%s3 + $0x78] sm:$0xff]
    %v1419 = vld [vmem:[%s3 + $0x80] sm:$0xff]
    %v1420 = vld [vmem:[%s3 + $0x88] sm:$0xff]
    %v1421 = vld [vmem:[%s3 + $0x90] sm:$0xff]
    %v1422 = vld [vmem:[%s3 + $0x98] sm:$0xff]
    %v1423 = vld [vmem:[%s3 + $0xa0] sm:$0xff]
    %v1424 = vld [vmem:[%s3 + $0xa8] sm:$0xff]
    %v1425 = vld [vmem:[%s3 + $0xb0] sm:$0xff]
    %v1426 = vld [vmem:[%s3 + $0xb8] sm:$0xff]
    %v1427 = vld [vmem:[%s3 + $0xc0] sm:$0xff]
    %v1428 = vld [vmem:[%s3 + $0xc8] sm:$0xff]
    %v1429 = vld [vmem:[%s3 + $0xd0] sm:$0xff]
    %v1430 = vld [vmem:[%s3 + $0xd8] sm:$0xff]
    %v1431 = vld [vmem:[%s3 + $0xe0] sm:$0xff]
    %v1432 = vld [vmem:[%s3 + $0xe8] sm:$0xff]
    %v1433 = vld [vmem:[%s3 + $0xf0] sm:$0xff]
    %v1434 = vld [vmem:[%s3 + $0xf8] sm:$0xff]
    %v1435 = vld [vmem:[%s3 + $0x100] sm:$0xff]
    %v1436 = vld [vmem:[%s3 + $0x108] sm:$0xff]
    %v1437 = vld [vmem:[%s3 + $0x110] sm:$0xff]
    %v1438 = vld [vmem:[%s3 + $0x118] sm:$0xff]
    %v1439 = vld [vmem:[%s3 + $0x120] sm:$0xff]
    %v1440 = vld [vmem:[%s3 + $0x128] sm:$0xff]
    %v1441 = vld [vmem:[%s3 + $0x130] sm:$0xff]
    %v1442 = vld [vmem:[%s3 + $0x138] sm:$0xff]
    %v1443 = vld [vmem:[%s3 + $0x140] sm:$0xff]
    %v1444 = vld [vmem:[%s3 + $0x148] sm:$0xff]
    %v1445 = vld [vmem:[%s3 + $0x150] sm:$0xff]
    %v1446 = vld [vmem:[%s3 + $0x158] sm:$0xff]
    %v1447 = vld [vmem:[%s3 + $0x160] sm:$0xff]
    %v1448 = vld [vmem:[%s3 + $0x168] sm:$0xff]
    %v1449 = vld [vmem:[%s3 + $0x170] sm:$0xff]
    %v1450 = vld [vmem:[%s3 + $0x178] sm:$0xff]
    %v1451 = vld [vmem:[%s3 + $0x180] sm:$0xff]
    %v1452 = vld [vmem:[%s3 + $0x188] sm:$0xff]
    %v1453 = vld [vmem:[%s3 + $0x190] sm:$0xff]
    %v1454 = vld [vmem:[%s3 + $0x198] sm:$0xff]
    %v1455 = vld [vmem:[%s3 + $0x1a0] sm:$0xff]
    %v1456 = vld [vmem:[%s3 + $0x1a8] sm:$0xff]
    %v1457 = vld [vmem:[%s3 + $0x1b0] sm:$0xff]
    %v1458 = vld [vmem:[%s3 + $0x1b8] sm:$0xff]
    %v1459 = vld [vmem:[%s3 + $0x1c0] sm:$0xff]
    %v1460 = vld [vmem:[%s3 + $0x1c8] sm:$0xff]
    %v1461 = vld [vmem:[%s3 + $0x1d0] sm:$0xff]
    %v1462 = vld [vmem:[%s3 + $0x1d8] sm:$0xff]
    %v1463 = vld [vmem:[%s3 + $0x1e0] sm:$0xff]
    %v1464 = vld [vmem:[%s3 + $0x1e8] sm:$0xff]
    %v1465 = vld [vmem:[%s3 + $0x1f0] sm:$0xff]
    %v1466 = vld [vmem:[%s3 + $0x1f8] sm:$0xff]
    %v1467 = vld [vmem:[%s3 + $0x200] sm:$0xff]
    %v1468 = vld [vmem:[%s3 + $0x208] sm:$0xff]
    %v1469 = vld [vmem:[%s3 + $0x210] sm:$0xff]
    %v1470 = vld [vmem:[%s3 + $0x218] sm:$0xff]
    %v1471 = vld [vmem:[%s3 + $0x220] sm:$0xff]
    %v1472 = vld [vmem:[%s3 + $0x228] sm:$0xff]
    %v1473 = vld [vmem:[%s3 + $0x230] sm:$0xff]
    %v1474 = vld [vmem:[%s3 + $0x238] sm:$0xff]
    %v1475 = vld [vmem:[%s3 + $0x240] sm:$0xff]
    %v1476 = vld [vmem:[%s3 + $0x248] sm:$0xff]
    %v1477 = vld [vmem:[%s3 + $0x250] sm:$0xff]
    %v1478 = vld [vmem:[%s3 + $0x258] sm:$0xff]
    %v1479 = vld [vmem:[%s3 + $0x260] sm:$0xff]
    %v1480 = vld [vmem:[%s3 + $0x268] sm:$0xff]
    %v1481 = vld [vmem:[%s3 + $0x270] sm:$0xff]
    %v1482 = vld [vmem:[%s3 + $0x278] sm:$0xff]
    %v1483 = vld [vmem:[%s3 + $0x280] sm:$0xff]
    %v1484 = vld [vmem:[%s3 + $0x288] sm:$0xff]
    %v1485 = vld [vmem:[%s3 + $0x290] sm:$0xff]
    %v1486 = vld [vmem:[%s3 + $0x298] sm:$0xff]
    %v1487 = vld [vmem:[%s3 + $0x2a0] sm:$0xff]
    %v1488 = vld [vmem:[%s3 + $0x2a8] sm:$0xff]
    %v1489 = vld [vmem:[%s3 + $0x2b0] sm:$0xff]
    %v1490 = vld [vmem:[%s3 + $0x2b8] sm:$0xff]
    %v1491 = vld [vmem:[%s3 + $0x2c0] sm:$0xff]
    %v1492 = vld [vmem:[%s3 + $0x2c8] sm:$0xff]
    %v1493 = vld [vmem:[%s3 + $0x2d0] sm:$0xff]
    %v1494 = vld [vmem:[%s3 + $0x2d8] sm:$0xff]
    %v1495 = vld [vmem:[%s3 + $0x2e0] sm:$0xff]
    %v1496 = vld [vmem:[%s3 + $0x2e8] sm:$0xff]
    %v1497 = vld [vmem:[%s3 + $0x2f0] sm:$0xff]
    %v1498 = vld [vmem:[%s3 + $0x2f8] sm:$0xff]
    %v1499 = vld [vmem:[%s3 + $0x300] sm:$0xff]
    %v1500 = vld [vmem:[%s3 + $0x308] sm:$0xff]
    %v1501 = vld [vmem:[%s3 + $0x310] sm:$0xff]
    %v1502 = vld [vmem:[%s3 + $0x318] sm:$0xff]
    %v1503 = vld [vmem:[%s3 + $0x320] sm:$0xff]
    %v1504 = vld [vmem:[%s3 + $0x328] sm:$0xff]
    %v1505 = vld [vmem:[%s3 + $0x330] sm:$0xff]
    %v1506 = vld [vmem:[%s3 + $0x338] sm:$0xff]
    %v1507 = vld [vmem:[%s3 + $0x340] sm:$0xff]
    %v1508 = vld [vmem:[%s3 + $0x348] sm:$0xff]
    %v1509 = vld [vmem:[%s3 + $0x350] sm:$0xff]
    %v1510 = vld [vmem:[%s3 + $0x358] sm:$0xff]
    %v1511 = vld [vmem:[%s3 + $0x360] sm:$0xff]
    %v1512 = vld [vmem:[%s3 + $0x368] sm:$0xff]
    %v1513 = vld [vmem:[%s3 + $0x370] sm:$0xff]
    %v1514 = vld [vmem:[%s3 + $0x378] sm:$0xff]
    %v1515 = vld [vmem:[%s3 + $0x380] sm:$0xff]
    %v1516 = vld [vmem:[%s3 + $0x388] sm:$0xff]
    %v1517 = vld [vmem:[%s3 + $0x390] sm:$0xff]
    %v1518 = vld [vmem:[%s3 + $0x398] sm:$0xff]
    %v1519 = vld [vmem:[%s3 + $0x3a0] sm:$0xff]
    %v1520 = vld [vmem:[%s3 + $0x3a8] sm:$0xff]
    %v1521 = vld [vmem:[%s3 + $0x3b0] sm:$0xff]
    %v1522 = vld [vmem:[%s3 + $0x3b8] sm:$0xff]
    %v1523 = vld [vmem:[%s3 + $0x3c0] sm:$0xff]
    %v1524 = vld [vmem:[%s3 + $0x3c8] sm:$0xff]
    %v1525 = vld [vmem:[%s3 + $0x3d0] sm:$0xff]
    %v1526 = vld [vmem:[%s3 + $0x3d8] sm:$0xff]
    %v1527 = vld [vmem:[%s3 + $0x3e0] sm:$0xff]
    %v1528 = vld [vmem:[%s3 + $0x3e8] sm:$0xff]
    %v1529 = vld [vmem:[%s3 + $0x3f0] sm:$0xff]
    %v1530 = vld [vmem:[%s3 + $0x3f8] sm:$0xff]
    %v1531 = vld [vmem:[%s3 + $0x400] sm:$0xff]
    %v1532 = vld [vmem:[%s3 + $0x408] sm:$0xff]
    %v1533 = vld [vmem:[%s3 + $0x410] sm:$0xff]
    %v1534 = vld [vmem:[%s3 + $0x418] sm:$0xff]
    %v1535 = vld [vmem:[%s3 + $0x420] sm:$0xff]
    %v1536 = vld [vmem:[%s3 + $0x428] sm:$0xff]
    %v1537 = vld [vmem:[%s3 + $0x430] sm:$0xff]
    %v1538 = vld [vmem:[%s3 + $0x438] sm:$0xff]
    %v1539 = vld [vmem:[%s3 + $0x440] sm:$0xff]
    %v1540 = vld [vmem:[%s3 + $0x448] sm:$0xff]
    %v1541 = vld [vmem:[%s3 + $0x450] sm:$0xff]
    %v1542 = vld [vmem:[%s3 + $0x458] sm:$0xff]
    %v1543 = vld [vmem:[%s3 + $0x460] sm:$0xff]
    %v1544 = vld [vmem:[%s3 + $0x468] sm:$0xff]
    %v1545 = vld [vmem:[%s3 + $0x470] sm:$0xff]
    %v1546 = vld [vmem:[%s3 + $0x478] sm:$0xff]
    %v1547 = vld [vmem:[%s3 + $0x480] sm:$0xff]
    %v1548 = vld [vmem:[%s3 + $0x488] sm:$0xff]
    %v1549 = vld [vmem:[%s3 + $0x490] sm:$0xff]
    %v1550 = vld [vmem:[%s3 + $0x498] sm:$0xff]
    %v1551 = vld [vmem:[%s3 + $0x4a0] sm:$0xff]
    %v1552 = vld [vmem:[%s3 + $0x4a8] sm:$0xff]
    %v1553 = vld [vmem:[%s3 + $0x4b0] sm:$0xff]
    %v1554 = vld [vmem:[%s3 + $0x4b8] sm:$0xff]
    %v1555 = vld [vmem:[%s3 + $0x4c0] sm:$0xff]
    %v1556 = vld [vmem:[%s3 + $0x4c8] sm:$0xff]
    %v1557 = vld [vmem:[%s3 + $0x4d0] sm:$0xff]
    %v1558 = vld [vmem:[%s3 + $0x4d8] sm:$0xff]
    %v1559 = vld [vmem:[%s3 + $0x4e0] sm:$0xff]
    %v1560 = vld [vmem:[%s3 + $0x4e8] sm:$0xff]
    %v1561 = vld [vmem:[%s3 + $0x4f0] sm:$0xff]
    %v1562 = vld [vmem:[%s3 + $0x4f8] sm:$0xff]
    %v1563 = vld [vmem:[%s3 + $0x500] sm:$0xff]
    %v1564 = vld [vmem:[%s3 + $0x508] sm:$0xff]
    %v1565 = vld [vmem:[%s3 + $0x510] sm:$0xff]
    %v1566 = vld [vmem:[%s3 + $0x518] sm:$0xff]
    %v1567 = vld [vmem:[%s3 + $0x520] sm:$0xff]
    %v1568 = vld [vmem:[%s3 + $0x528] sm:$0xff]
    %v1569 = vld [vmem:[%s3 + $0x530] sm:$0xff]
    %v1570 = vld [vmem:[%s3 + $0x538] sm:$0xff]
    %v1571 = vld [vmem:[%s3 + $0x540] sm:$0xff]
    %v1572 = vld [vmem:[%s3 + $0x548] sm:$0xff]
    %v1573 = vld [vmem:[%s3 + $0x550] sm:$0xff]
    %v1574 = vld [vmem:[%s3 + $0x558] sm:$0xff]
    %v1575 = vld [vmem:[%s3 + $0x560] sm:$0xff]
    %v1576 = vld [vmem:[%s3 + $0x568] sm:$0xff]
    %v1577 = vld [vmem:[%s3 + $0x570] sm:$0xff]
    %v1578 = vld [vmem:[%s3 + $0x578] sm:$0xff]
    %v1579 = vld [vmem:[%s3 + $0x580] sm:$0xff]
    %v1580 = vld [vmem:[%s3 + $0x588] sm:$0xff]
    %v1581 = vld [vmem:[%s3 + $0x590] sm:$0xff]
    %v1582 = vld [vmem:[%s3 + $0x598] sm:$0xff]
    %v1583 = vld [vmem:[%s3 + $0x5a0] sm:$0xff]
    %v1584 = vld [vmem:[%s3 + $0x5a8] sm:$0xff]
    %v1585 = vld [vmem:[%s3 + $0x5b0] sm:$0xff]
    %v1586 = vld [vmem:[%s3 + $0x5b8] sm:$0xff]
    %v1587 = vld [vmem:[%s3 + $0x5c0] sm:$0xff]
    %v1588 = vld [vmem:[%s3 + $0x5c8] sm:$0xff]
    %v1589 = vld [vmem:[%s3 + $0x5d0] sm:$0xff]
    %v1590 = vld [vmem:[%s3 + $0x5d8] sm:$0xff]
    %v1591 = vld [vmem:[%s3 + $0x5e0] sm:$0xff]
    %v1592 = vld [vmem:[%s3 + $0x5e8] sm:$0xff]
    %v1593 = vld [vmem:[%s3 + $0x5f0] sm:$0xff]
    %v1594 = vld [vmem:[%s3 + $0x5f8] sm:$0xff]
    %v1595 = vld [vmem:[%s3 + $0x600] sm:$0xff]
    %v1596 = vld [vmem:[%s3 + $0x608] sm:$0xff]
    %v1597 = vld [vmem:[%s3 + $0x610] sm:$0xff]
    %v1598 = vld [vmem:[%s3 + $0x618] sm:$0xff]
    %v1599 = vld [vmem:[%s3 + $0x620] sm:$0xff]
    %v1600 = vld [vmem:[%s3 + $0x628] sm:$0xff]
    %v1601 = vld [vmem:[%s3 + $0x630] sm:$0xff]
    %v1602 = vld [vmem:[%s3 + $0x638] sm:$0xff]
    %v1603 = vld [vmem:[%s3 + $0x640] sm:$0xff]
    %v1604 = vld [vmem:[%s3 + $0x648] sm:$0xff]
    %v1605 = vld [vmem:[%s3 + $0x650] sm:$0xff]
    %v1606 = vld [vmem:[%s3 + $0x658] sm:$0xff]
    %v1607 = vld [vmem:[%s3 + $0x660] sm:$0xff]
    %v1608 = vld [vmem:[%s3 + $0x668] sm:$0xff]
    %v1609 = vld [vmem:[%s3 + $0x670] sm:$0xff]
    %v1610 = vld [vmem:[%s3 + $0x678] sm:$0xff]
    %v1611 = vld [vmem:[%s3 + $0x680] sm:$0xff]
    %v1612 = vld [vmem:[%s3 + $0x688] sm:$0xff]
    %v1613 = vld [vmem:[%s3 + $0x690] sm:$0xff]
    %v1614 = vld [vmem:[%s3 + $0x698] sm:$0xff]
    %v1615 = vld [vmem:[%s3 + $0x6a0] sm:$0xff]
    %v1616 = vld [vmem:[%s3 + $0x6a8] sm:$0xff]
    %v1617 = vld [vmem:[%s3 + $0x6b0] sm:$0xff]
    %v1618 = vld [vmem:[%s3 + $0x6b8] sm:$0xff]
    %v1619 = vld [vmem:[%s3 + $0x6c0] sm:$0xff]
    %v1620 = vld [vmem:[%s3 + $0x6c8] sm:$0xff]
    %v1621 = vld [vmem:[%s3 + $0x6d0] sm:$0xff]
    %v1622 = vld [vmem:[%s3 + $0x6d8] sm:$0xff]
    %v1623 = vld [vmem:[%s3 + $0x6e0] sm:$0xff]
    %v1624 = vld [vmem:[%s3 + $0x6e8] sm:$0xff]
    %v1625 = vld [vmem:[%s3 + $0x6f0] sm:$0xff]
    %v1626 = vld [vmem:[%s3 + $0x6f8] sm:$0xff]
    %v1627 = vld [vmem:[%s3 + $0x700] sm:$0xff]
    %v1628 = vld [vmem:[%s3 + $0x708] sm:$0xff]
    %v1629 = vld [vmem:[%s3 + $0x710] sm:$0xff]
    %v1630 = vld [vmem:[%s3 + $0x718] sm:$0xff]
    %v1631 = vld [vmem:[%s3 + $0x720] sm:$0xff]
    %v1632 = vld [vmem:[%s3 + $0x728] sm:$0xff]
    %v1633 = vld [vmem:[%s3 + $0x730] sm:$0xff]
    %v1634 = vld [vmem:[%s3 + $0x738] sm:$0xff]
    %v1635 = vld [vmem:[%s3 + $0x740] sm:$0xff]
    %v1636 = vld [vmem:[%s3 + $0x748] sm:$0xff]
    %v1637 = vld [vmem:[%s3 + $0x750] sm:$0xff]
    %v1638 = vld [vmem:[%s3 + $0x758] sm:$0xff]
    %v1639 = vld [vmem:[%s3 + $0x760] sm:$0xff]
    %v1640 = vld [vmem:[%s3 + $0x768] sm:$0xff]
    %v1641 = vld [vmem:[%s3 + $0x770] sm:$0xff]
    %v1642 = vld [vmem:[%s3 + $0x778] sm:$0xff]
    %v1643 = vld [vmem:[%s3 + $0x780] sm:$0xff]
    %v1644 = vld [vmem:[%s3 + $0x788] sm:$0xff]
    %v1645 = vld [vmem:[%s3 + $0x790] sm:$0xff]
    %v1646 = vld [vmem:[%s3 + $0x798] sm:$0xff]
    %v1647 = vld [vmem:[%s3 + $0x7a0] sm:$0xff]
    %v1648 = vld [vmem:[%s3 + $0x7a8] sm:$0xff]
    %v1649 = vld [vmem:[%s3 + $0x7b0] sm:$0xff]
    %v1650 = vld [vmem:[%s3 + $0x7b8] sm:$0xff]
    %v1651 = vld [vmem:[%s3 + $0x7c0] sm:$0xff]
    %v1652 = vld [vmem:[%s3 + $0x7c8] sm:$0xff]
    %v1653 = vld [vmem:[%s3 + $0x7d0] sm:$0xff]
    %v1654 = vld [vmem:[%s3 + $0x7d8] sm:$0xff]
    %v1655 = vld [vmem:[%s3 + $0x7e0] sm:$0xff]
    %v1656 = vld [vmem:[%s3 + $0x7e8] sm:$0xff]
    %v1657 = vld [vmem:[%s3 + $0x7f0] sm:$0xff]
    %v1658 = vld [vmem:[%s3 + $0x7f8] sm:$0xff]
    %v1659 = vld [vmem:[%s3 + $0x800] sm:$0xff]
    %v1660 = vld [vmem:[%s3 + $0x808] sm:$0xff]
    %v1661 = vld [vmem:[%s3 + $0x810] sm:$0xff]
    %v1662 = vld [vmem:[%s3 + $0x818] sm:$0xff]
    %v1663 = vld [vmem:[%s3 + $0x820] sm:$0xff]
    %v1664 = vld [vmem:[%s3 + $0x828] sm:$0xff]
    %v1665 = vld [vmem:[%s3 + $0x830] sm:$0xff]
    %v1666 = vld [vmem:[%s3 + $0x838] sm:$0xff]
    %v1667 = vld [vmem:[%s3 + $0x840] sm:$0xff]
    %v1668 = vld [vmem:[%s3 + $0x848] sm:$0xff]
    %v1669 = vld [vmem:[%s3 + $0x850] sm:$0xff]
    %v1670 = vld [vmem:[%s3 + $0x858] sm:$0xff]
    %v1671 = vld [vmem:[%s3 + $0x860] sm:$0xff]
    %v1672 = vld [vmem:[%s3 + $0x868] sm:$0xff]
    %v1673 = vld [vmem:[%s3 + $0x870] sm:$0xff]
    %v1674 = vld [vmem:[%s3 + $0x878] sm:$0xff]
    %v1675 = vld [vmem:[%s3 + $0x880] sm:$0xff]
    %v1676 = vld [vmem:[%s3 + $0x888] sm:$0xff]
    %v1677 = vld [vmem:[%s3 + $0x890] sm:$0xff]
    %v1678 = vld [vmem:[%s3 + $0x898] sm:$0xff]
    %v1679 = vld [vmem:[%s3 + $0x8a0] sm:$0xff]
    %v1680 = vld [vmem:[%s3 + $0x8a8] sm:$0xff]
    %v1681 = vld [vmem:[%s3 + $0x8b0] sm:$0xff]
    %v1682 = vld [vmem:[%s3 + $0x8b8] sm:$0xff]
    %v1683 = vld [vmem:[%s3 + $0x8c0] sm:$0xff]
    %v1684 = vld [vmem:[%s3 + $0x8c8] sm:$0xff]
    %v1685 = vld [vmem:[%s3 + $0x8d0] sm:$0xff]
    %v1686 = vld [vmem:[%s3 + $0x8d8] sm:$0xff]
    %v1687 = vld [vmem:[%s3 + $0x8e0] sm:$0xff]
    %v1688 = vld [vmem:[%s3 + $0x8e8] sm:$0xff]
    %v1689 = vld [vmem:[%s3 + $0x8f0] sm:$0xff]
    %v1690 = vld [vmem:[%s3 + $0x8f8] sm:$0xff]
    %v1691 = vld [vmem:[#allocation7] sm:$0x1]
    %v1693 = vlaneseq
    %v1694 = vshrl.u32 %v1693, 7
    %v1695 = vsub.s32 0, %v1694
    %v1696 = vrot.slane %v1691, %v1695
    %1698 = vmatprep.subr.mxu0 0.0
    %1699 = vmatpush1.msra.mxu0 %v1403
    %1700 = vmatprep.subr.mxu0 0.0
    %1701 = vmatpush1.msra.mxu0 %v1404
    %1702 = vmatprep.subr.mxu0 0.0
    %1703 = vmatpush1.msra.mxu0 %v1405
    %1704 = vmatprep.subr.mxu0 0.0
    %1705 = vmatpush1.msra.mxu0 %v1406
    %1706 = vmatprep.subr.mxu0 0.0
    %1707 = vmatpush1.msra.mxu0 %v1407
    %1708 = vmatprep.subr.mxu0 0.0
    %1709 = vmatpush1.msra.mxu0 %v1408
    %1710 = vmatprep.subr.mxu0 0.0
    %1711 = vmatpush1.msra.mxu0 %v1409
    %1712 = vmatprep.subr.mxu0 0.0
    %1713 = vmatpush1.msra.mxu0 %v1410
    %1714 = vmatprep.subr.mxu0 0.0
    %1715 = vmatpush1.msra.mxu0 %v1411
    %1716 = vmatprep.subr.mxu0 0.0
    %1717 = vmatpush1.msra.mxu0 %v1412
    %1718 = vmatprep.subr.mxu0 0.0
    %1719 = vmatpush1.msra.mxu0 %v1413
    %1720 = vmatprep.subr.mxu0 0.0
    %1721 = vmatpush1.msra.mxu0 %v1414
    %1722 = vmatprep.subr.mxu0 0.0
    %1723 = vmatpush1.msra.mxu0 %v1415
    %1724 = vmatprep.subr.mxu0 0.0
    %1725 = vmatpush1.msra.mxu0 %v1416
    %1726 = vmatprep.subr.mxu0 0.0
    %1727 = vmatpush1.msra.mxu0 %v1417
    %1728 = vmatprep.subr.mxu0 0.0
    %1729 = vmatpush1.msra.mxu0 %v1418
    %1730 = vmatprep.subr.mxu0 0.0
    %1731 = vmatpush1.msra.mxu0 %v1419
    %1732 = vmatprep.subr.mxu0 0.0
    %1733 = vmatpush1.msra.mxu0 %v1420
    %1734 = vmatprep.subr.mxu0 0.0
    %1735 = vmatpush1.msra.mxu0 %v1421
    %1736 = vmatprep.subr.mxu0 0.0
    %1737 = vmatpush1.msra.mxu0 %v1422
    %1738 = vmatprep.subr.mxu0 0.0
    %1739 = vmatpush1.msra.mxu0 %v1423
    %1740 = vmatprep.subr.mxu0 0.0
    %1741 = vmatpush1.msra.mxu0 %v1424
    %1742 = vmatprep.subr.mxu0 0.0
    %1743 = vmatpush1.msra.mxu0 %v1425
    %1744 = vmatprep.subr.mxu0 0.0
    %1745 = vmatpush1.msra.mxu0 %v1426
    %1746 = vmatprep.subr.mxu0 0.0
    %1747 = vmatpush1.msra.mxu0 %v1427
    %1748 = vmatprep.subr.mxu0 0.0
    %1749 = vmatpush1.msra.mxu0 %v1428
    %1750 = vmatprep.subr.mxu0 0.0
    %1751 = vmatpush1.msra.mxu0 %v1429
    %1752 = vmatprep.subr.mxu0 0.0
    %1753 = vmatpush1.msra.mxu0 %v1430
    %1754 = vmatprep.subr.mxu0 0.0
    %1755 = vmatpush1.msra.mxu0 %v1431
    %1756 = vmatprep.subr.mxu0 0.0
    %1757 = vmatpush1.msra.mxu0 %v1432
    %1758 = vmatprep.subr.mxu0 0.0
    %1759 = vmatpush1.msra.mxu0 %v1433
    %1760 = vmatprep.subr.mxu0 0.0
    %1761 = vmatpush1.msra.mxu0 %v1434
    %1762 = vmatprep.mubr.f32.mxu0 %v1386
    %1763 = vmatmul.mubr.f32.gmra.mrb[0].mxu0 %v1385
    %v1764 = vpop.f32.mrb[0].mxu0
    %v1765 = vadd.f32 %v1696, %v1764
    %v1766 = vpop.f32.mrb[0].mxu0
    %1767 = vdwg.mxu0
    %1768 = vmatprep.subr.mxu0 0.0
    %1769 = vmatpush1.msra.mxu0 %v1435
    %1770 = vmatprep.subr.mxu0 0.0
    %1771 = vmatpush1.msra.mxu0 %v1436
    %1772 = vmatprep.subr.mxu0 0.0
    %1773 = vmatpush1.msra.mxu0 %v1437
    %1774 = vmatprep.subr.mxu0 0.0
    %1775 = vmatpush1.msra.mxu0 %v1438
    %1776 = vmatprep.subr.mxu0 0.0
    %1777 = vmatpush1.msra.mxu0 %v1439
    %1778 = vmatprep.subr.mxu0 0.0
    %1779 = vmatpush1.msra.mxu0 %v1440
    %1780 = vmatprep.subr.mxu0 0.0
    %1781 = vmatpush1.msra.mxu0 %v1441
    %1782 = vmatprep.subr.mxu0 0.0
    %1783 = vmatpush1.msra.mxu0 %v1442
    %1784 = vmatprep.subr.mxu0 0.0
    %1785 = vmatpush1.msra.mxu0 %v1443
    %1786 = vmatprep.subr.mxu0 0.0
    %1787 = vmatpush1.msra.mxu0 %v1444
    %1788 = vmatprep.subr.mxu0 0.0
    %1789 = vmatpush1.msra.mxu0 %v1445
    %1790 = vmatprep.subr.mxu0 0.0
    %1791 = vmatpush1.msra.mxu0 %v1446
    %1792 = vmatprep.subr.mxu0 0.0
    %1793 = vmatpush1.msra.mxu0 %v1447
    %1794 = vmatprep.subr.mxu0 0.0
    %1795 = vmatpush1.msra.mxu0 %v1448
    %1796 = vmatprep.subr.mxu0 0.0
    %1797 = vmatpush1.msra.mxu0 %v1449
    %1798 = vmatprep.subr.mxu0 0.0
    %1799 = vmatpush1.msra.mxu0 %v1450
    %1800 = vmatprep.subr.mxu0 0.0
    %1801 = vmatpush1.msra.mxu0 %v1451
    %1802 = vmatprep.subr.mxu0 0.0
    %1803 = vmatpush1.msra.mxu0 %v1452
    %1804 = vmatprep.subr.mxu0 0.0
    %1805 = vmatpush1.msra.mxu0 %v1453
    %1806 = vmatprep.subr.mxu0 0.0
    %1807 = vmatpush1.msra.mxu0 %v1454
    %1808 = vmatprep.subr.mxu0 0.0
    %1809 = vmatpush1.msra.mxu0 %v1455
    %1810 = vmatprep.subr.mxu0 0.0
    %1811 = vmatpush1.msra.mxu0 %v1456
    %1812 = vmatprep.subr.mxu0 0.0
    %1813 = vmatpush1.msra.mxu0 %v1457
    %1814 = vmatprep.subr.mxu0 0.0
    %1815 = vmatpush1.msra.mxu0 %v1458
    %1816 = vmatprep.subr.mxu0 0.0
    %1817 = vmatpush1.msra.mxu0 %v1459
    %1818 = vmatprep.subr.mxu0 0.0
    %1819 = vmatpush1.msra.mxu0 %v1460
    %1820 = vmatprep.subr.mxu0 0.0
    %1821 = vmatpush1.msra.mxu0 %v1461
    %1822 = vmatprep.subr.mxu0 0.0
    %1823 = vmatpush1.msra.mxu0 %v1462
    %1824 = vmatprep.subr.mxu0 0.0
    %1825 = vmatpush1.msra.mxu0 %v1463
    %1826 = vmatprep.subr.mxu0 0.0
    %1827 = vmatpush1.msra.mxu0 %v1464
    %1828 = vmatprep.subr.mxu0 0.0
    %1829 = vmatpush1.msra.mxu0 %v1465
    %1830 = vmatprep.subr.mxu0 0.0
    %1831 = vmatpush1.msra.mxu0 %v1466
    %1832 = vmatprep.mubr.f32.mxu0 %v1388
    %1833 = vmatmul.mubr.f32.gmra.mrb[0].mxu0 %v1387
    %v1834 = vpop.f32.mrb[0].mxu0
    %v1835 = vadd.f32 %v1765, %v1834
    %v1836 = vpop.f32.mrb[0].mxu0
    %1837 = vdwg.mxu0
    %1838 = vmatprep.subr.mxu0 0.0
    %1839 = vmatpush1.msra.mxu0 %v1467
    %1840 = vmatprep.subr.mxu0 0.0
    %1841 = vmatpush1.msra.mxu0 %v1468
    %1842 = vmatprep.subr.mxu0 0.0
    %1843 = vmatpush1.msra.mxu0 %v1469
    %1844 = vmatprep.subr.mxu0 0.0
    %1845 = vmatpush1.msra.mxu0 %v1470
    %1846 = vmatprep.subr.mxu0 0.0
    %1847 = vmatpush1.msra.mxu0 %v1471
    %1848 = vmatprep.subr.mxu0 0.0
    %1849 = vmatpush1.msra.mxu0 %v1472
    %1850 = vmatprep.subr.mxu0 0.0
    %1851 = vmatpush1.msra.mxu0 %v1473
    %1852 = vmatprep.subr.mxu0 0.0
    %1853 = vmatpush1.msra.mxu0 %v1474
    %1854 = vmatprep.subr.mxu0 0.0
    %1855 = vmatpush1.msra.mxu0 %v1475
    %1856 = vmatprep.subr.mxu0 0.0
    %1857 = vmatpush1.msra.mxu0 %v1476
    %1858 = vmatprep.subr.mxu0 0.0
    %1859 = vmatpush1.msra.mxu0 %v1477
    %1860 = vmatprep.subr.mxu0 0.0
    %1861 = vmatpush1.msra.mxu0 %v1478
    %1862 = vmatprep.subr.mxu0 0.0
    %1863 = vmatpush1.msra.mxu0 %v1479
    %1864 = vmatprep.subr.mxu0 0.0
    %1865 = vmatpush1.msra.mxu0 %v1480
    %1866 = vmatprep.subr.mxu0 0.0
    %1867 = vmatpush1.msra.mxu0 %v1481
    %1868 = vmatprep.subr.mxu0 0.0
    %1869 = vmatpush1.msra.mxu0 %v1482
    %1870 = vmatprep.subr.mxu0 0.0
    %1871 = vmatpush1.msra.mxu0 %v1483
    %1872 = vmatprep.subr.mxu0 0.0
    %1873 = vmatpush1.msra.mxu0 %v1484
    %1874 = vmatprep.subr.mxu0 0.0
    %1875 = vmatpush1.msra.mxu0 %v1485
    %1876 = vmatprep.subr.mxu0 0.0
    %1877 = vmatpush1.msra.mxu0 %v1486
    %1878 = vmatprep.subr.mxu0 0.0
    %1879 = vmatpush1.msra.mxu0 %v1487
    %1880 = vmatprep.subr.mxu0 0.0
    %1881 = vmatpush1.msra.mxu0 %v1488
    %1882 = vmatprep.subr.mxu0 0.0
    %1883 = vmatpush1.msra.mxu0 %v1489
    %1884 = vmatprep.subr.mxu0 0.0
    %1885 = vmatpush1.msra.mxu0 %v1490
    %1886 = vmatprep.subr.mxu0 0.0
    %1887 = vmatpush1.msra.mxu0 %v1491
    %1888 = vmatprep.subr.mxu0 0.0
    %1889 = vmatpush1.msra.mxu0 %v1492
    %1890 = vmatprep.subr.mxu0 0.0
    %1891 = vmatpush1.msra.mxu0 %v1493
    %1892 = vmatprep.subr.mxu0 0.0
    %1893 = vmatpush1.msra.mxu0 %v1494
    %1894 = vmatprep.subr.mxu0 0.0
    %1895 = vmatpush1.msra.mxu0 %v1495
    %1896 = vmatprep.subr.mxu0 0.0
    %1897 = vmatpush1.msra.mxu0 %v1496
    %1898 = vmatprep.subr.mxu0 0.0
    %1899 = vmatpush1.msra.mxu0 %v1497
    %1900 = vmatprep.subr.mxu0 0.0
    %1901 = vmatpush1.msra.mxu0 %v1498
    %1902 = vmatprep.mubr.f32.mxu0 %v1390
    %1903 = vmatmul.mubr.f32.gmra.mrb[0].mxu0 %v1389
    %v1904 = vpop.f32.mrb[0].mxu0
    %v1905 = vadd.f32 %v1835, %v1904
    %v1906 = vpop.f32.mrb[0].mxu0
    %1907 = vdwg.mxu0
    %1908 = vmatprep.subr.mxu0 0.0
    %1909 = vmatpush1.msra.mxu0 %v1499
    %1910 = vmatprep.subr.mxu0 0.0
    %1911 = vmatpush1.msra.mxu0 %v1500
    %1912 = vmatprep.subr.mxu0 0.0
    %1913 = vmatpush1.msra.mxu0 %v1501
    %1914 = vmatprep.subr.mxu0 0.0
    %1915 = vmatpush1.msra.mxu0 %v1502
    %1916 = vmatprep.subr.mxu0 0.0
    %1917 = vmatpush1.msra.mxu0 %v1503
    %1918 = vmatprep.subr.mxu0 0.0
    %1919 = vmatpush1.msra.mxu0 %v1504
    %1920 = vmatprep.subr.mxu0 0.0
    %1921 = vmatpush1.msra.mxu0 %v1505
    %1922 = vmatprep.subr.mxu0 0.0
    %1923 = vmatpush1.msra.mxu0 %v1506
    %1924 = vmatprep.subr.mxu0 0.0
    %1925 = vmatpush1.msra.mxu0 %v1507
    %1926 = vmatprep.subr.mxu0 0.0
    %1927 = vmatpush1.msra.mxu0 %v1508
    %1928 = vmatprep.subr.mxu0 0.0
    %1929 = vmatpush1.msra.mxu0 %v1509
    %1930 = vmatprep.subr.mxu0 0.0
    %1931 = vmatpush1.msra.mxu0 %v1510
    %1932 = vmatprep.subr.mxu0 0.0
    %1933 = vmatpush1.msra.mxu0 %v1511
    %1934 = vmatprep.subr.mxu0 0.0
    %1935 = vmatpush1.msra.mxu0 %v1512
    %1936 = vmatprep.subr.mxu0 0.0
    %1937 = vmatpush1.msra.mxu0 %v1513
    %1938 = vmatprep.subr.mxu0 0.0
    %1939 = vmatpush1.msra.mxu0 %v1514
    %1940 = vmatprep.subr.mxu0 0.0
    %1941 = vmatpush1.msra.mxu0 %v1515
    %1942 = vmatprep.subr.mxu0 0.0
    %1943 = vmatpush1.msra.mxu0 %v1516
    %1944 = vmatprep.subr.mxu0 0.0
    %1945 = vmatpush1.msra.mxu0 %v1517
    %1946 = vmatprep.subr.mxu0 0.0
    %1947 = vmatpush1.msra.mxu0 %v1518
    %1948 = vmatprep.subr.mxu0 0.0
    %1949 = vmatpush1.msra.mxu0 %v1519
    %1950 = vmatprep.subr.mxu0 0.0
    %1951 = vmatpush1.msra.mxu0 %v1520
    %1952 = vmatprep.subr.mxu0 0.0
    %1953 = vmatpush1.msra.mxu0 %v1521
    %1954 = vmatprep.subr.mxu0 0.0
    %1955 = vmatpush1.msra.mxu0 %v1522
    %1956 = vmatprep.subr.mxu0 0.0
    %1957 = vmatpush1.msra.mxu0 %v1523
    %1958 = vmatprep.subr.mxu0 0.0
    %1959 = vmatpush1.msra.mxu0 %v1524
    %1960 = vmatprep.subr.mxu0 0.0
    %1961 = vmatpush1.msra.mxu0 %v1525
    %1962 = vmatprep.subr.mxu0 0.0
    %1963 = vmatpush1.msra.mxu0 %v1526
    %1964 = vmatprep.subr.mxu0 0.0
    %1965 = vmatpush1.msra.mxu0 %v1527
    %1966 = vmatprep.subr.mxu0 0.0
    %1967 = vmatpush1.msra.mxu0 %v1528
    %1968 = vmatprep.subr.mxu0 0.0
    %1969 = vmatpush1.msra.mxu0 %v1529
    %1970 = vmatprep.subr.mxu0 0.0
    %1971 = vmatpush1.msra.mxu0 %v1530
    %1972 = vmatprep.mubr.f32.mxu0 %v1392
    %1973 = vmatmul.mubr.f32.gmra.mrb[0].mxu0 %v1391
    %v1974 = vpop.f32.mrb[0].mxu0
    %v1975 = vadd.f32 %v1905, %v1974
    %v1976 = vpop.f32.mrb[0].mxu0
    %1977 = vdwg.mxu0
    %1978 = vmatprep.subr.mxu0 0.0
    %1979 = vmatpush1.msra.mxu0 %v1531
    %1980 = vmatprep.subr.mxu0 0.0
    %1981 = vmatpush1.msra.mxu0 %v1532
    %1982 = vmatprep.subr.mxu0 0.0
    %1983 = vmatpush1.msra.mxu0 %v1533
    %1984 = vmatprep.subr.mxu0 0.0
    %1985 = vmatpush1.msra.mxu0 %v1534
    %1986 = vmatprep.subr.mxu0 0.0
    %1987 = vmatpush1.msra.mxu0 %v1535
    %1988 = vmatprep.subr.mxu0 0.0
    %1989 = vmatpush1.msra.mxu0 %v1536
    %1990 = vmatprep.subr.mxu0 0.0
    %1991 = vmatpush1.msra.mxu0 %v1537
    %1992 = vmatprep.subr.mxu0 0.0
    %1993 = vmatpush1.msra.mxu0 %v1538
    %1994 = vmatprep.subr.mxu0 0.0
    %1995 = vmatpush1.msra.mxu0 %v1539
    %1996 = vmatprep.subr.mxu0 0.0
    %1997 = vmatpush1.msra.mxu0 %v1540
    %1998 = vmatprep.subr.mxu0 0.0
    %1999 = vmatpush1.msra.mxu0 %v1541
    %2000 = vmatprep.subr.mxu0 0.0
    %2001 = vmatpush1.msra.mxu0 %v1542
    %2002 = vmatprep.subr.mxu0 0.0
    %2003 = vmatpush1.msra.mxu0 %v1543
    %2004 = vmatprep.subr.mxu0 0.0
    %2005 = vmatpush1.msra.mxu0 %v1544
    %2006 = vmatprep.subr.mxu0 0.0
    %2007 = vmatpush1.msra.mxu0 %v1545
    %2008 = vmatprep.subr.mxu0 0.0
    %2009 = vmatpush1.msra.mxu0 %v1546
    %2010 = vmatprep.subr.mxu0 0.0
    %2011 = vmatpush1.msra.mxu0 %v1547
    %2012 = vmatprep.subr.mxu0 0.0
    %2013 = vmatpush1.msra.mxu0 %v1548
    %2014 = vmatprep.subr.mxu0 0.0
    %2015 = vmatpush1.msra.mxu0 %v1549
    %2016 = vmatprep.subr.mxu0 0.0
    %2017 = vmatpush1.msra.mxu0 %v1550
    %2018 = vmatprep.subr.mxu0 0.0
    %2019 = vmatpush1.msra.mxu0 %v1551
    %2020 = vmatprep.subr.mxu0 0.0
    %2021 = vmatpush1.msra.mxu0 %v1552
    %2022 = vmatprep.subr.mxu0 0.0
    %2023 = vmatpush1.msra.mxu0 %v1553
    %2024 = vmatprep.subr.mxu0 0.0
    %2025 = vmatpush1.msra.mxu0 %v1554
    %2026 = vmatprep.subr.mxu0 0.0
    %2027 = vmatpush1.msra.mxu0 %v1555
    %2028 = vmatprep.subr.mxu0 0.0
    %2029 = vmatpush1.msra.mxu0 %v1556
    %2030 = vmatprep.subr.mxu0 0.0
    %2031 = vmatpush1.msra.mxu0 %v1557
    %2032 = vmatprep.subr.mxu0 0.0
    %2033 = vmatpush1.msra.mxu0 %v1558
    %2034 = vmatprep.subr.mxu0 0.0
    %2035 = vmatpush1.msra.mxu0 %v1559
    %2036 = vmatprep.subr.mxu0 0.0
    %2037 = vmatpush1.msra.mxu0 %v1560
    %2038 = vmatprep.subr.mxu0 0.0
    %2039 = vmatpush1.msra.mxu0 %v1561
    %2040 = vmatprep.subr.mxu0 0.0
    %2041 = vmatpush1.msra.mxu0 %v1562
    %2042 = vmatprep.mubr.f32.mxu0 %v1394
    %2043 = vmatmul.mubr.f32.gmra.mrb[0].mxu0 %v1393
    %v2044 = vpop.f32.mrb[0].mxu0
    %v2045 = vadd.f32 %v1975, %v2044
    %v2046 = vpop.f32.mrb[0].mxu0
    %2047 = vdwg.mxu0
    %2048 = vmatprep.subr.mxu0 0.0
    %2049 = vmatpush1.msra.mxu0 %v1563
    %2050 = vmatprep.subr.mxu0 0.0
    %2051 = vmatpush1.msra.mxu0 %v1564
    %2052 = vmatprep.subr.mxu0 0.0
    %2053 = vmatpush1.msra.mxu0 %v1565
    %2054 = vmatprep.subr.mxu0 0.0
    %2055 = vmatpush1.msra.mxu0 %v1566
    %2056 = vmatprep.subr.mxu0 0.0
    %2057 = vmatpush1.msra.mxu0 %v1567
    %2058 = vmatprep.subr.mxu0 0.0
    %2059 = vmatpush1.msra.mxu0 %v1568
    %2060 = vmatprep.subr.mxu0 0.0
    %2061 = vmatpush1.msra.mxu0 %v1569
    %2062 = vmatprep.subr.mxu0 0.0
    %2063 = vmatpush1.msra.mxu0 %v1570
    %2064 = vmatprep.subr.mxu0 0.0
    %2065 = vmatpush1.msra.mxu0 %v1571
    %2066 = vmatprep.subr.mxu0 0.0
    %2067 = vmatpush1.msra.mxu0 %v1572
    %2068 = vmatprep.subr.mxu0 0.0
    %2069 = vmatpush1.msra.mxu0 %v1573
    %2070 = vmatprep.subr.mxu0 0.0
    %2071 = vmatpush1.msra.mxu0 %v1574
    %2072 = vmatprep.subr.mxu0 0.0
    %2073 = vmatpush1.msra.mxu0 %v1575
    %2074 = vmatprep.subr.mxu0 0.0
    %2075 = vmatpush1.msra.mxu0 %v1576
    %2076 = vmatprep.subr.mxu0 0.0
    %2077 = vmatpush1.msra.mxu0 %v1577
    %2078 = vmatprep.subr.mxu0 0.0
    %2079 = vmatpush1.msra.mxu0 %v1578
    %2080 = vmatprep.subr.mxu0 0.0
    %2081 = vmatpush1.msra.mxu0 %v1579
    %2082 = vmatprep.subr.mxu0 0.0
    %2083 = vmatpush1.msra.mxu0 %v1580
    %2084 = vmatprep.subr.mxu0 0.0
    %2085 = vmatpush1.msra.mxu0 %v1581
    %2086 = vmatprep.subr.mxu0 0.0
    %2087 = vmatpush1.msra.mxu0 %v1582
    %2088 = vmatprep.subr.mxu0 0.0
    %2089 = vmatpush1.msra.mxu0 %v1583
    %2090 = vmatprep.subr.mxu0 0.0
    %2091 = vmatpush1.msra.mxu0 %v1584
    %2092 = vmatprep.subr.mxu0 0.0
    %2093 = vmatpush1.msra.mxu0 %v1585
    %2094 = vmatprep.subr.mxu0 0.0
    %2095 = vmatpush1.msra.mxu0 %v1586
    %2096 = vmatprep.subr.mxu0 0.0
    %2097 = vmatpush1.msra.mxu0 %v1587
    %2098 = vmatprep.subr.mxu0 0.0
    %2099 = vmatpush1.msra.mxu0 %v1588
    %2100 = vmatprep.subr.mxu0 0.0
    %2101 = vmatpush1.msra.mxu0 %v1589
    %2102 = vmatprep.subr.mxu0 0.0
    %2103 = vmatpush1.msra.mxu0 %v1590
    %2104 = vmatprep.subr.mxu0 0.0
    %2105 = vmatpush1.msra.mxu0 %v1591
    %2106 = vmatprep.subr.mxu0 0.0
    %2107 = vmatpush1.msra.mxu0 %v1592
    %2108 = vmatprep.subr.mxu0 0.0
    %2109 = vmatpush1.msra.mxu0 %v1593
    %2110 = vmatprep.subr.mxu0 0.0
    %2111 = vmatpush1.msra.mxu0 %v1594
    %2112 = vmatprep.mubr.f32.mxu0 %v1396
    %2113 = vmatmul.mubr.f32.gmra.mrb[0].mxu0 %v1395
    %v2114 = vpop.f32.mrb[0].mxu0
    %v2115 = vadd.f32 %v2045, %v2114
    %v2116 = vpop.f32.mrb[0].mxu0
    %2117 = vdwg.mxu0
    %2118 = vmatprep.subr.mxu0 0.0
    %2119 = vmatpush1.msra.mxu0 %v1595
    %2120 = vmatprep.subr.mxu0 0.0
    %2121 = vmatpush1.msra.mxu0 %v1596
    %2122 = vmatprep.subr.mxu0 0.0
    %2123 = vmatpush1.msra.mxu0 %v1597
    %2124 = vmatprep.subr.mxu0 0.0
    %2125 = vmatpush1.msra.mxu0 %v1598
    %2126 = vmatprep.subr.mxu0 0.0
    %2127 = vmatpush1.msra.mxu0 %v1599
    %2128 = vmatprep.subr.mxu0 0.0
    %2129 = vmatpush1.msra.mxu0 %v1600
    %2130 = vmatprep.subr.mxu0 0.0
    %2131 = vmatpush1.msra.mxu0 %v1601
    %2132 = vmatprep.subr.mxu0 0.0
    %2133 = vmatpush1.msra.mxu0 %v1602
    %2134 = vmatprep.subr.mxu0 0.0
    %2135 = vmatpush1.msra.mxu0 %v1603
    %2136 = vmatprep.subr.mxu0 0.0
    %2137 = vmatpush1.msra.mxu0 %v1604
    %2138 = vmatprep.subr.mxu0 0.0
    %2139 = vmatpush1.msra.mxu0 %v1605
    %2140 = vmatprep.subr.mxu0 0.0
    %2141 = vmatpush1.msra.mxu0 %v1606
    %2142 = vmatprep.subr.mxu0 0.0
    %2143 = vmatpush1.msra.mxu0 %v1607
    %2144 = vmatprep.subr.mxu0 0.0
    %2145 = vmatpush1.msra.mxu0 %v1608
    %2146 = vmatprep.subr.mxu0 0.0
    %2147 = vmatpush1.msra.mxu0 %v1609
    %2148 = vmatprep.subr.mxu0 0.0
    %2149 = vmatpush1.msra.mxu0 %v1610
    %2150 = vmatprep.subr.mxu0 0.0
    %2151 = vmatpush1.msra.mxu0 %v1611
    %2152 = vmatprep.subr.mxu0 0.0
    %2153 = vmatpush1.msra.mxu0 %v1612
    %2154 = vmatprep.subr.mxu0 0.0
    %2155 = vmatpush1.msra.mxu0 %v1613
    %2156 = vmatprep.subr.mxu0 0.0
    %2157 = vmatpush1.msra.mxu0 %v1614
    %2158 = vmatprep.subr.mxu0 0.0
    %2159 = vmatpush1.msra.mxu0 %v1615
    %2160 = vmatprep.subr.mxu0 0.0
    %2161 = vmatpush1.msra.mxu0 %v1616
    %2162 = vmatprep.subr.mxu0 0.0
    %2163 = vmatpush1.msra.mxu0 %v1617
    %2164 = vmatprep.subr.mxu0 0.0
    %2165 = vmatpush1.msra.mxu0 %v1618
    %2166 = vmatprep.subr.mxu0 0.0
    %2167 = vmatpush1.msra.mxu0 %v1619
    %2168 = vmatprep.subr.mxu0 0.0
    %2169 = vmatpush1.msra.mxu0 %v1620
    %2170 = vmatprep.subr.mxu0 0.0
    %2171 = vmatpush1.msra.mxu0 %v1621
    %2172 = vmatprep.subr.mxu0 0.0
    %2173 = vmatpush1.msra.mxu0 %v1622
    %2174 = vmatprep.subr.mxu0 0.0
    %2175 = vmatpush1.msra.mxu0 %v1623
    %2176 = vmatprep.subr.mxu0 0.0
    %2177 = vmatpush1.msra.mxu0 %v1624
    %2178 = vmatprep.subr.mxu0 0.0
    %2179 = vmatpush1.msra.mxu0 %v1625
    %2180 = vmatprep.subr.mxu0 0.0
    %2181 = vmatpush1.msra.mxu0 %v1626
    %2182 = vmatprep.mubr.f32.mxu0 %v1398
    %2183 = vmatmul.mubr.f32.gmra.mrb[0].mxu0 %v1397
    %v2184 = vpop.f32.mrb[0].mxu0
    %v2185 = vadd.f32 %v2115, %v2184
    %v2186 = vpop.f32.mrb[0].mxu0
    %2187 = vdwg.mxu0
    %2188 = vmatprep.subr.mxu0 0.0
    %2189 = vmatpush1.msra.mxu0 %v1627
    %2190 = vmatprep.subr.mxu0 0.0
    %2191 = vmatpush1.msra.mxu0 %v1628
    %2192 = vmatprep.subr.mxu0 0.0
    %2193 = vmatpush1.msra.mxu0 %v1629
    %2194 = vmatprep.subr.mxu0 0.0
    %2195 = vmatpush1.msra.mxu0 %v1630
    %2196 = vmatprep.subr.mxu0 0.0
    %2197 = vmatpush1.msra.mxu0 %v1631
    %2198 = vmatprep.subr.mxu0 0.0
    %2199 = vmatpush1.msra.mxu0 %v1632
    %2200 = vmatprep.subr.mxu0 0.0
    %2201 = vmatpush1.msra.mxu0 %v1633
    %2202 = vmatprep.subr.mxu0 0.0
    %2203 = vmatpush1.msra.mxu0 %v1634
    %2204 = vmatprep.subr.mxu0 0.0
    %2205 = vmatpush1.msra.mxu0 %v1635
    %2206 = vmatprep.subr.mxu0 0.0
    %2207 = vmatpush1.msra.mxu0 %v1636
    %2208 = vmatprep.subr.mxu0 0.0
    %2209 = vmatpush1.msra.mxu0 %v1637
    %2210 = vmatprep.subr.mxu0 0.0
    %2211 = vmatpush1.msra.mxu0 %v1638
    %2212 = vmatprep.subr.mxu0 0.0
    %2213 = vmatpush1.msra.mxu0 %v1639
    %2214 = vmatprep.subr.mxu0 0.0
    %2215 = vmatpush1.msra.mxu0 %v1640
    %2216 = vmatprep.subr.mxu0 0.0
    %2217 = vmatpush1.msra.mxu0 %v1641
    %2218 = vmatprep.subr.mxu0 0.0
    %2219 = vmatpush1.msra.mxu0 %v1642
    %2220 = vmatprep.subr.mxu0 0.0
    %2221 = vmatpush1.msra.mxu0 %v1643
    %2222 = vmatprep.subr.mxu0 0.0
    %2223 = vmatpush1.msra.mxu0 %v1644
    %2224 = vmatprep.subr.mxu0 0.0
    %2225 = vmatpush1.msra.mxu0 %v1645
    %2226 = vmatprep.subr.mxu0 0.0
    %2227 = vmatpush1.msra.mxu0 %v1646
    %2228 = vmatprep.subr.mxu0 0.0
    %2229 = vmatpush1.msra.mxu0 %v1647
    %2230 = vmatprep.subr.mxu0 0.0
    %2231 = vmatpush1.msra.mxu0 %v1648
    %2232 = vmatprep.subr.mxu0 0.0
    %2233 = vmatpush1.msra.mxu0 %v1649
    %2234 = vmatprep.subr.mxu0 0.0
    %2235 = vmatpush1.msra.mxu0 %v1650
    %2236 = vmatprep.subr.mxu0 0.0
    %2237 = vmatpush1.msra.mxu0 %v1651
    %2238 = vmatprep.subr.mxu0 0.0
    %2239 = vmatpush1.msra.mxu0 %v1652
    %2240 = vmatprep.subr.mxu0 0.0
    %2241 = vmatpush1.msra.mxu0 %v1653
    %2242 = vmatprep.subr.mxu0 0.0
    %2243 = vmatpush1.msra.mxu0 %v1654
    %2244 = vmatprep.subr.mxu0 0.0
    %2245 = vmatpush1.msra.mxu0 %v1655
    %2246 = vmatprep.subr.mxu0 0.0
    %2247 = vmatpush1.msra.mxu0 %v1656
    %2248 = vmatprep.subr.mxu0 0.0
    %2249 = vmatpush1.msra.mxu0 %v1657
    %2250 = vmatprep.subr.mxu0 0.0
    %2251 = vmatpush1.msra.mxu0 %v1658
    %2252 = vmatprep.mubr.f32.mxu0 %v1400
    %2253 = vmatmul.mubr.f32.gmra.mrb[0].mxu0 %v1399
    %v2254 = vpop.f32.mrb[0].mxu0
    %v2255 = vadd.f32 %v2185, %v2254
    %v2256 = vpop.f32.mrb[0].mxu0
    %2257 = vdwg.mxu0
    %2258 = vmatprep.subr.mxu0 0.0
    %2259 = vmatpush1.msra.mxu0 %v1659
    %2260 = vmatprep.subr.mxu0 0.0
    %2261 = vmatpush1.msra.mxu0 %v1660
    %2262 = vmatprep.subr.mxu0 0.0
    %2263 = vmatpush1.msra.mxu0 %v1661
    %2264 = vmatprep.subr.mxu0 0.0
    %2265 = vmatpush1.msra.mxu0 %v1662
    %2266 = vmatprep.subr.mxu0 0.0
    %2267 = vmatpush1.msra.mxu0 %v1663
    %2268 = vmatprep.subr.mxu0 0.0
    %2269 = vmatpush1.msra.mxu0 %v1664
    %2270 = vmatprep.subr.mxu0 0.0
    %2271 = vmatpush1.msra.mxu0 %v1665
    %2272 = vmatprep.subr.mxu0 0.0
    %2273 = vmatpush1.msra.mxu0 %v1666
    %2274 = vmatprep.subr.mxu0 0.0
    %2275 = vmatpush1.msra.mxu0 %v1667
    %2276 = vmatprep.subr.mxu0 0.0
    %2277 = vmatpush1.msra.mxu0 %v1668
    %2278 = vmatprep.subr.mxu0 0.0
    %2279 = vmatpush1.msra.mxu0 %v1669
    %2280 = vmatprep.subr.mxu0 0.0
    %2281 = vmatpush1.msra.mxu0 %v1670
    %2282 = vmatprep.subr.mxu0 0.0
    %2283 = vmatpush1.msra.mxu0 %v1671
    %2284 = vmatprep.subr.mxu0 0.0
    %2285 = vmatpush1.msra.mxu0 %v1672
    %2286 = vmatprep.subr.mxu0 0.0
    %2287 = vmatpush1.msra.mxu0 %v1673
    %2288 = vmatprep.subr.mxu0 0.0
    %2289 = vmatpush1.msra.mxu0 %v1674
    %2290 = vmatprep.subr.mxu0 0.0
    %2291 = vmatpush1.msra.mxu0 %v1675
    %2292 = vmatprep.subr.mxu0 0.0
    %2293 = vmatpush1.msra.mxu0 %v1676
    %2294 = vmatprep.subr.mxu0 0.0
    %2295 = vmatpush1.msra.mxu0 %v1677
    %2296 = vmatprep.subr.mxu0 0.0
    %2297 = vmatpush1.msra.mxu0 %v1678
    %2298 = vmatprep.subr.mxu0 0.0
    %2299 = vmatpush1.msra.mxu0 %v1679
    %2300 = vmatprep.subr.mxu0 0.0
    %2301 = vmatpush1.msra.mxu0 %v1680
    %2302 = vmatprep.subr.mxu0 0.0
    %2303 = vmatpush1.msra.mxu0 %v1681
    %2304 = vmatprep.subr.mxu0 0.0
    %2305 = vmatpush1.msra.mxu0 %v1682
    %2306 = vmatprep.subr.mxu0 0.0
    %2307 = vmatpush1.msra.mxu0 %v1683
    %2308 = vmatprep.subr.mxu0 0.0
    %2309 = vmatpush1.msra.mxu0 %v1684
    %2310 = vmatprep.subr.mxu0 0.0
    %2311 = vmatpush1.msra.mxu0 %v1685
    %2312 = vmatprep.subr.mxu0 0.0
    %2313 = vmatpush1.msra.mxu0 %v1686
    %2314 = vmatprep.subr.mxu0 0.0
    %2315 = vmatpush1.msra.mxu0 %v1687
    %2316 = vmatprep.subr.mxu0 0.0
    %2317 = vmatpush1.msra.mxu0 %v1688
    %2318 = vmatprep.subr.mxu0 0.0
    %2319 = vmatpush1.msra.mxu0 %v1689
    %2320 = vmatprep.subr.mxu0 0.0
    %2321 = vmatpush1.msra.mxu0 %v1690
    %2322 = vmatprep.mubr.f32.mxu0 %v1402
    %2323 = vmatmul.mubr.f32.gmra.mrb[0].mxu0 %v1401
    %v2324 = vpop.f32.mrb[0].mxu0
    %v2325 = vadd.f32 %v2255, %v2324
    %v2326 = vpop.f32.mrb[0].mxu0
    %2327 = vdwg.mxu0
    %2329 = vrot.lane.b32.xlu0 %v2325, 127
    %v2330 = vpop.permute.xlu0 %2329
    %v2332 = vmax.f32 %v2325, %v2330
    %v2333 = vsub.f32 %v2325, %v2330
    %v2334 = vand.u32 2147483647, %v2333
    %v2335 = vsub.f32 0.0, %v2334
    %v2336 = vmul.f32 %v2335, 1.442695
    %v2337 = vpow.pop %v2336
    %v2338 = vadd.f32 %v2337, 1.0
    %v2339 = vlog2.pop %v2338
    %v2340 = vmul.f32 %v2339, 0.6931472
    %v2341 = vadd.f32 %v2332, %v2340
    %2343 = vset.pattern.permute.xlu0 0
    %2344 = vperm.xlu0 %2343, %v2341
    %v2345 = vpop.permute.xlu0 %2344
    %v2347 = vsub.f32 %v2325, %v2345
    %vm2348 = vcmask 15360
    %2349 = vst.msk [vmem:[%s5] sm:$0xff] %vm2348, %v2347
    // Predicated region
    $region38: #{tpu_custom_call.1} parent=1 // pred_check
      _
    $region39: #{tpu_custom_call.1} parent=1 // pred_check_branch
      %2351 = sbr.rel (0) target = $region41
    $region40: #{tpu_custom_call.1} parent=1 // pred_region
      _
    $region41: #{tpu_custom_call.1} parent=1 // pred_fallthru
      _
    // Predicated region
    $region42: #{tpu_custom_call.1} parent=1 // pred_check
      _
    $region43: #{tpu_custom_call.1} parent=1 // pred_check_branch
      %2353 = sbr.rel (0) target = $region45
    $region44: #{tpu_custom_call.1} parent=1 // pred_region
      _
    $region45: #{tpu_custom_call.1} parent=1 // pred_fallthru
      _
    %2354 = vsyncpa [#allocation3], 1
    %2355 = vsyncpa [#allocation5], 1
    %2356 = vsyncpa [#allocation8], 1

</llo_original>
